<compile_context>
chip_gen: v7x
topology: tpu7x:2x2x1
jax: 0.10.0
libtpu: 0.0.40
codegen_flags: <defaults>
</compile_context>

<pallas_src>
import jax
import jax.numpy as jnp
import numpy as np
from jax.experimental import pallas as pl
from jax.experimental.pallas import tpu as pltpu


# ----------------------- host-side weight/mask preparation --------------------

def _masked_dw_weights(w, K, pad, dil, C, CP, H, W):
    """Per-tap, per-channel depthwise weights with the zero-padding mask folded in.

    Returns
      wm   : (K*K, CP, H*W) f32 — wm[t, c, q] = w[c, i, j] * 1[tap t's source pixel for
             output position q lies inside the (H, W) image]; rows C..CP-1 are zero.
      offs : list of K*K static flat-index offsets (dh*W + dw) for the in-kernel rolls.
    """
    HW = H * W
    q = jnp.arange(HW)
    hh = q // W
    ww = q % W
    wt = w.reshape(C, K * K).astype(jnp.float32)
    taps, offs = [], []
    for i in range(K):
        for j in range(K):
            dh = i * dil - pad
            dw = j * dil - pad
            offs.append(dh * W + dw)
            valid = ((hh + dh >= 0) & (hh + dh < H) &
                     (ww + dw >= 0) & (ww + dw < W)).astype(jnp.float32)        # (HW,)
            taps.append(wt[:, i * K + j][:, None] * valid[None, :])             # (C, HW)
    wm = jnp.stack(taps, axis=0)                                                # (K*K, C, HW)
    wm = jnp.pad(wm, ((0, 0), (0, CP - C), (0, 0)))                             # (K*K, CP, HW)
    return wm, offs


# ------------------------------ fused kernel ----------------------------------

def _make_resconv_kernel(NB, CP, O, HW, offs1, offs2):

    def kernel(x_ref, wm1_ref, b1_ref, wm2_ref, b2_ref, w2_ref, bp_ref, out_ref):
        # x_ref  : (NB, CP, HW)   flat, channel-padded input (also the residual branch u)
        # wm*_ref: (K*K, CP, HW)  masked per-tap depthwise weights (lane-dense)
        # b*_ref : (CP, 1)        depthwise biases            w2_ref: (2O, 2CP) block-diag pw
        # bp_ref : (O, 1)         pointwise bias              out_ref: (NB, O, HW)

        def dw_stage(src, wm_ref, b_ref, offs):
            # One roll (XLU) + one broadcast mul + add (VPU) per tap, over all CP planes;
            # the padding mask is already folded into wm, so no padded scratch / zeroing.
            acc = None
            for t, off in enumerate(offs):
                shifted = src if off == 0 else pltpu.roll(src, (-off) % HW, axis=1)
                term = wm_ref[t] * shifted
                acc = term if acc is None else acc + term
            return acc + b_ref[...]                       # (CP, 1) broadcast over lanes

        for nb in range(NB):                              # small, unrolled (NB <= 2 here)
            u = x_ref[nb]                                 # (CP, HW) residual branch
            y = dw_stage(u, wm1_ref, b1_ref, offs1)       # dw_conv
            z = dw_stage(y, wm2_ref, b2_ref, offs2)       # dw_d_conv (dilated)

            # Pointwise conv for BOTH branches as one MXU matmul:
            #   [wp 0 ; 0 wp] @ [u ; z]  ->  [wp@u ; wp@z]
            stacked = jnp.concatenate([u, z], axis=0)     # (2CP, HW), sublane-aligned
            p = jnp.dot(w2_ref[...], stacked,
                        precision=jax.lax.Precision.HIGHEST,
                        preferred_element_type=jnp.float32)    # (2O, HW)
            pu = p[:O] + bp_ref[...]
            py = p[O:] + bp_ref[...]
            out_ref[nb] = (pu * py).astype(out_ref.dtype)      # dense 256-lane stores

    return kernel


# --------------------------------- wrapper -------------------------------------

def resconv_forward(x, params, *, k, d):
    N, C, H, W = x.shape
    K1, pad1, dil1 = 2 * d - 1, (2 * d - 1) // 2, 1
    K2, pad2, dil2 = k // d, (k // d // 2) * d, d
    # The PyTorch module only preserves spatial dims when k//d is odd — guard it.
    assert K2 % 2 == 1, "k // d must be odd so dw_d_conv preserves the spatial size"
    O = params["wp"].shape[0]
    HW = H * W
    CP = max(8, ((C + 7) // 8) * 8)          # pad channels to a full sublane tile (free ops-wise)

    # Grid: at most 2 balanced "parallel" steps (keeps v7x's 2 TCs busy & balanced);
    # the rest of the batch is folded into the block (single-TC v5e/v6e pay the per-step
    # overhead at most twice instead of N times).
    G = 2 if (N >= 2 and N % 2 == 0) else 1
    NB = N // G

    # Single flat, channel-padded input view (one DMA stream; residual branch reuses it).
    x_flat = jnp.pad(x.reshape(N, C, HW).astype(jnp.float32),
                     ((0, 0), (0, CP - C), (0, 0)))                       # (N, CP, HW)

    # Compact lane-dense masked depthwise weights + static roll offsets.
    wm1, offs1 = _masked_dw_weights(params["w1"], K1, pad1, dil1, C, CP, H, W)
    wm2, offs2 = _masked_dw_weights(params["w2"], K2, pad2, dil2, C, CP, H, W)
    b1 = jnp.pad(params["b1"].astype(jnp.float32), (0, CP - C)).reshape(CP, 1)
    b2 = jnp.pad(params["b2"].astype(jnp.float32), (0, CP - C)).reshape(CP, 1)

    # Block-diagonal pointwise weight so both branches share one MXU matmul.
    wp = jnp.pad(params["wp"].astype(jnp.float32), ((0, 0), (0, CP - C)))   # (O, CP)
    zeros = jnp.zeros_like(wp)
    w2blk = jnp.concatenate(
        [jnp.concatenate([wp, zeros], axis=1),
         jnp.concatenate([zeros, wp], axis=1)], axis=0)                     # (2O, 2CP)
    bp = params["bp"].astype(jnp.float32).reshape(O, 1)

    kernel = _make_resconv_kernel(NB, CP, O, HW, offs1, offs2)

    out_flat = pl.pallas_call(
        kernel,
        out_shape=jax.ShapeDtypeStruct((N, O, HW), jnp.float32),
        grid_spec=pltpu.PrefetchScalarGridSpec(
            num_scalar_prefetch=0,
            grid=(G,),
            in_specs=[
                pl.BlockSpec((NB, CP, HW), lambda n: (n, 0, 0)),           # x (flat, padded)
                pl.BlockSpec((K1 * K1, CP, HW), lambda n: (0, 0, 0)),      # dw_conv masked w
                pl.BlockSpec((CP, 1), lambda n: (0, 0)),                   # dw_conv bias
                pl.BlockSpec((K2 * K2, CP, HW), lambda n: (0, 0, 0)),      # dw_d_conv masked w
                pl.BlockSpec((CP, 1), lambda n: (0, 0)),                   # dw_d_conv bias
                pl.BlockSpec((2 * O, 2 * CP), lambda n: (0, 0)),           # block-diag pw weight
                pl.BlockSpec((O, 1), lambda n: (0, 0)),                    # pw bias
            ],
            out_specs=pl.BlockSpec((NB, O, HW), lambda n: (n, 0, 0)),
        ),
        compiler_params=pltpu.CompilerParams(
            dimension_semantics=("parallel",)),           # shards the 2 steps across v7x TCs
    )(x_flat, wm1, b1, wm2, b2, w2blk, bp)

    # free metadata reshape back to NCHW
    return out_flat.reshape(N, O, H, W)


# --------------------------- pure-JAX reference --------------------------------

def _conv_ref(x, w, b, pad, dil, groups):
    out = jax.lax.conv_general_dilated(
        x, w, window_strides=(1, 1),
        padding=[(pad, pad), (pad, pad)],
        rhs_dilation=(dil, dil),
        dimension_numbers=("NCHW", "OIHW", "NCHW"),
        feature_group_count=groups)
    return out + b[None, :, None, None]


def resconv_ref(x, params, *, k, d):
    dim = x.shape[1]
    K1, pad1 = 2 * d - 1, (2 * d - 1) // 2
    K2, pad2, dil2 = k // d, (k // d // 2) * d, d
    w1 = params["w1"].reshape(dim, 1, K1, K1)
    w2 = params["w2"].reshape(dim, 1, K2, K2)
    wp = params["wp"][:, :, None, None]
    u = _conv_ref(x, wp, params["bp"], 0, 1, 1)
    y = _conv_ref(x, w1, params["b1"], pad1, 1, dim)
    y = _conv_ref(y, w2, params["b2"], pad2, dil2, dim)
    y = _conv_ref(y, wp, params["bp"], 0, 1, 1)
    return u * y


# ----------------------------------- main ---------------------------------------

if __name__ == "__main__":
    dim, k, d, out_ch = 4, 6, 2, 8        # k // d = 3 (odd) so spatial dims are preserved
    N, H, W = 2, 16, 16
    K1, K2 = 2 * d - 1, k // d

    key = jax.random.PRNGKey(0)
    kx, k1, k2, k3, k4, k5, k6 = jax.random.split(key, 7)
    x = jax.random.normal(kx, (N, dim, H, W), jnp.float32)

    params = {
        "w1": 0.2 * jax.random.normal(k1, (dim, K1, K1), jnp.float32),
        "b1": 0.1 * jax.random.normal(k2, (dim,), jnp.float32),
        "w2": 0.2 * jax.random.normal(k3, (dim, K2, K2), jnp.float32),
        "b2": 0.1 * jax.random.normal(k4, (dim,), jnp.float32),
        "wp": 0.2 * jax.random.normal(k5, (out_ch, dim), jnp.float32),
        "bp": 0.1 * jax.random.normal(k6, (out_ch,), jnp.float32),
    }

    out = jax.block_until_ready(resconv_forward(x, params, k=k, d=d))
    ref = jax.block_until_ready(resconv_ref(x, params, k=k, d=d))

    np.testing.assert_allclose(np.asarray(out), np.asarray(ref), rtol=1e-3, atol=1e-3)
    print("KERNEL_OK")
</pallas_src>

<mosaic_0001>
module attributes {stable_mosaic.version = 11 : i64} {
  func.func @kernel(%arg0: i32, %arg1: memref<1x8x256xf32, #tpu.memory_space<vmem>>, %arg2: memref<9x8x256xf32, #tpu.memory_space<vmem>>, %arg3: memref<8x1xf32, #tpu.memory_space<vmem>>, %arg4: memref<9x8x256xf32, #tpu.memory_space<vmem>>, %arg5: memref<8x1xf32, #tpu.memory_space<vmem>>, %arg6: memref<16x16xf32, #tpu.memory_space<vmem>>, %arg7: memref<8x1xf32, #tpu.memory_space<vmem>>, %arg8: memref<1x8x256xf32, #tpu.memory_space<vmem>>) attributes {dimension_semantics = [#tpu.dimension_semantics<parallel>], iteration_bounds = array<i64: 2>, scalar_prefetch = 0 : i64, scratch_operands = 0 : i64, tpu.core_type = #tpu.core_type<tc>, window_params = [{transform_indices = @transform_0, window_bounds = array<i64: 1, 8, 256>}, {pipeline_mode = #tpu.pipeline_mode<synchronous>, transform_indices = @transform_1, window_bounds = array<i64: 9, 8, 256>}, {pipeline_mode = #tpu.pipeline_mode<synchronous>, transform_indices = @transform_2, window_bounds = array<i64: 8, 1>}, {pipeline_mode = #tpu.pipeline_mode<synchronous>, transform_indices = @transform_3, window_bounds = array<i64: 9, 8, 256>}, {pipeline_mode = #tpu.pipeline_mode<synchronous>, transform_indices = @transform_4, window_bounds = array<i64: 8, 1>}, {pipeline_mode = #tpu.pipeline_mode<synchronous>, transform_indices = @transform_5, window_bounds = array<i64: 16, 16>}, {pipeline_mode = #tpu.pipeline_mode<synchronous>, transform_indices = @transform_6, window_bounds = array<i64: 8, 1>}, {transform_indices = @transform_7, window_bounds = array<i64: 1, 8, 256>}]} {
    %c0 = arith.constant 0 : index
    %c0_0 = arith.constant 0 : index
    %c0_1 = arith.constant 0 : index
    %0 = vector.load %arg1[%c0, %c0_0, %c0_1] : memref<1x8x256xf32, #tpu.memory_space<vmem>>, vector<1x8x256xf32>
    %1 = vector.shape_cast %0 : vector<1x8x256xf32> to vector<8x256xf32>
    %c17_i32 = arith.constant 17 : i32
    %2 = tpu.dynamic_rotate %1 by %c17_i32 dim 1 : vector<8x256xf32>, i32 -> vector<8x256xf32>
    %c0_2 = arith.constant 0 : index
    %c0_3 = arith.constant 0 : index
    %c0_4 = arith.constant 0 : index
    %3 = vector.load %arg2[%c0_2, %c0_3, %c0_4] : memref<9x8x256xf32, #tpu.memory_space<vmem>>, vector<1x8x256xf32>
    %4 = vector.shape_cast %3 : vector<1x8x256xf32> to vector<8x256xf32>
    %5 = arith.mulf %4, %2 : vector<8x256xf32>
    %c16_i32 = arith.constant 16 : i32
    %6 = tpu.dynamic_rotate %1 by %c16_i32 dim 1 : vector<8x256xf32>, i32 -> vector<8x256xf32>
    %c1 = arith.constant 1 : index
    %c0_5 = arith.constant 0 : index
    %c0_6 = arith.constant 0 : index
    %7 = vector.load %arg2[%c1, %c0_5, %c0_6] : memref<9x8x256xf32, #tpu.memory_space<vmem>>, vector<1x8x256xf32>
    %8 = vector.shape_cast %7 : vector<1x8x256xf32> to vector<8x256xf32>
    %9 = arith.mulf %8, %6 : vector<8x256xf32>
    %10 = arith.addf %5, %9 : vector<8x256xf32>
    %c15_i32 = arith.constant 15 : i32
    %11 = tpu.dynamic_rotate %1 by %c15_i32 dim 1 : vector<8x256xf32>, i32 -> vector<8x256xf32>
    %c2 = arith.constant 2 : index
    %c0_7 = arith.constant 0 : index
    %c0_8 = arith.constant 0 : index
    %12 = vector.load %arg2[%c2, %c0_7, %c0_8] : memref<9x8x256xf32, #tpu.memory_space<vmem>>, vector<1x8x256xf32>
    %13 = vector.shape_cast %12 : vector<1x8x256xf32> to vector<8x256xf32>
    %14 = arith.mulf %13, %11 : vector<8x256xf32>
    %15 = arith.addf %10, %14 : vector<8x256xf32>
    %c1_i32 = arith.constant 1 : i32
    %16 = tpu.dynamic_rotate %1 by %c1_i32 dim 1 : vector<8x256xf32>, i32 -> vector<8x256xf32>
    %c3 = arith.constant 3 : index
    %c0_9 = arith.constant 0 : index
    %c0_10 = arith.constant 0 : index
    %17 = vector.load %arg2[%c3, %c0_9, %c0_10] : memref<9x8x256xf32, #tpu.memory_space<vmem>>, vector<1x8x256xf32>
    %18 = vector.shape_cast %17 : vector<1x8x256xf32> to vector<8x256xf32>
    %19 = arith.mulf %18, %16 : vector<8x256xf32>
    %20 = arith.addf %15, %19 : vector<8x256xf32>
    %c4 = arith.constant 4 : index
    %c0_11 = arith.constant 0 : index
    %c0_12 = arith.constant 0 : index
    %21 = vector.load %arg2[%c4, %c0_11, %c0_12] : memref<9x8x256xf32, #tpu.memory_space<vmem>>, vector<1x8x256xf32>
    %22 = vector.shape_cast %21 : vector<1x8x256xf32> to vector<8x256xf32>
    %23 = arith.mulf %22, %1 : vector<8x256xf32>
    %24 = arith.addf %20, %23 : vector<8x256xf32>
    %c255_i32 = arith.constant 255 : i32
    %25 = tpu.dynamic_rotate %1 by %c255_i32 dim 1 : vector<8x256xf32>, i32 -> vector<8x256xf32>
    %c5 = arith.constant 5 : index
    %c0_13 = arith.constant 0 : index
    %c0_14 = arith.constant 0 : index
    %26 = vector.load %arg2[%c5, %c0_13, %c0_14] : memref<9x8x256xf32, #tpu.memory_space<vmem>>, vector<1x8x256xf32>
    %27 = vector.shape_cast %26 : vector<1x8x256xf32> to vector<8x256xf32>
    %28 = arith.mulf %27, %25 : vector<8x256xf32>
    %29 = arith.addf %24, %28 : vector<8x256xf32>
    %c241_i32 = arith.constant 241 : i32
    %30 = tpu.dynamic_rotate %1 by %c241_i32 dim 1 : vector<8x256xf32>, i32 -> vector<8x256xf32>
    %c6 = arith.constant 6 : index
    %c0_15 = arith.constant 0 : index
    %c0_16 = arith.constant 0 : index
    %31 = vector.load %arg2[%c6, %c0_15, %c0_16] : memref<9x8x256xf32, #tpu.memory_space<vmem>>, vector<1x8x256xf32>
    %32 = vector.shape_cast %31 : vector<1x8x256xf32> to vector<8x256xf32>
    %33 = arith.mulf %32, %30 : vector<8x256xf32>
    %34 = arith.addf %29, %33 : vector<8x256xf32>
    %c240_i32 = arith.constant 240 : i32
    %35 = tpu.dynamic_rotate %1 by %c240_i32 dim 1 : vector<8x256xf32>, i32 -> vector<8x256xf32>
    %c7 = arith.constant 7 : index
    %c0_17 = arith.constant 0 : index
    %c0_18 = arith.constant 0 : index
    %36 = vector.load %arg2[%c7, %c0_17, %c0_18] : memref<9x8x256xf32, #tpu.memory_space<vmem>>, vector<1x8x256xf32>
    %37 = vector.shape_cast %36 : vector<1x8x256xf32> to vector<8x256xf32>
    %38 = arith.mulf %37, %35 : vector<8x256xf32>
    %39 = arith.addf %34, %38 : vector<8x256xf32>
    %c239_i32 = arith.constant 239 : i32
    %40 = tpu.dynamic_rotate %1 by %c239_i32 dim 1 : vector<8x256xf32>, i32 -> vector<8x256xf32>
    %c8 = arith.constant 8 : index
    %c0_19 = arith.constant 0 : index
    %c0_20 = arith.constant 0 : index
    %41 = vector.load %arg2[%c8, %c0_19, %c0_20] : memref<9x8x256xf32, #tpu.memory_space<vmem>>, vector<1x8x256xf32>
    %42 = vector.shape_cast %41 : vector<1x8x256xf32> to vector<8x256xf32>
    %43 = arith.mulf %42, %40 : vector<8x256xf32>
    %44 = arith.addf %39, %43 : vector<8x256xf32>
    %c0_21 = arith.constant 0 : index
    %c0_22 = arith.constant 0 : index
    %45 = vector.load %arg3[%c0_21, %c0_22] : memref<8x1xf32, #tpu.memory_space<vmem>>, vector<8x1xf32>
    %46 = vector.broadcast %45 : vector<8x1xf32> to vector<8x256xf32>
    %47 = arith.addf %44, %46 : vector<8x256xf32>
    %c34_i32 = arith.constant 34 : i32
    %48 = tpu.dynamic_rotate %47 by %c34_i32 dim 1 : vector<8x256xf32>, i32 -> vector<8x256xf32>
    %c0_23 = arith.constant 0 : index
    %c0_24 = arith.constant 0 : index
    %c0_25 = arith.constant 0 : index
    %49 = vector.load %arg4[%c0_23, %c0_24, %c0_25] : memref<9x8x256xf32, #tpu.memory_space<vmem>>, vector<1x8x256xf32>
    %50 = vector.shape_cast %49 : vector<1x8x256xf32> to vector<8x256xf32>
    %51 = arith.mulf %50, %48 : vector<8x256xf32>
    %c32_i32 = arith.constant 32 : i32
    %52 = tpu.dynamic_rotate %47 by %c32_i32 dim 1 : vector<8x256xf32>, i32 -> vector<8x256xf32>
    %c1_26 = arith.constant 1 : index
    %c0_27 = arith.constant 0 : index
    %c0_28 = arith.constant 0 : index
    %53 = vector.load %arg4[%c1_26, %c0_27, %c0_28] : memref<9x8x256xf32, #tpu.memory_space<vmem>>, vector<1x8x256xf32>
    %54 = vector.shape_cast %53 : vector<1x8x256xf32> to vector<8x256xf32>
    %55 = arith.mulf %54, %52 : vector<8x256xf32>
    %56 = arith.addf %51, %55 : vector<8x256xf32>
    %c30_i32 = arith.constant 30 : i32
    %57 = tpu.dynamic_rotate %47 by %c30_i32 dim 1 : vector<8x256xf32>, i32 -> vector<8x256xf32>
    %c2_29 = arith.constant 2 : index
    %c0_30 = arith.constant 0 : index
    %c0_31 = arith.constant 0 : index
    %58 = vector.load %arg4[%c2_29, %c0_30, %c0_31] : memref<9x8x256xf32, #tpu.memory_space<vmem>>, vector<1x8x256xf32>
    %59 = vector.shape_cast %58 : vector<1x8x256xf32> to vector<8x256xf32>
    %60 = arith.mulf %59, %57 : vector<8x256xf32>
    %61 = arith.addf %56, %60 : vector<8x256xf32>
    %c2_i32 = arith.constant 2 : i32
    %62 = tpu.dynamic_rotate %47 by %c2_i32 dim 1 : vector<8x256xf32>, i32 -> vector<8x256xf32>
    %c3_32 = arith.constant 3 : index
    %c0_33 = arith.constant 0 : index
    %c0_34 = arith.constant 0 : index
    %63 = vector.load %arg4[%c3_32, %c0_33, %c0_34] : memref<9x8x256xf32, #tpu.memory_space<vmem>>, vector<1x8x256xf32>
    %64 = vector.shape_cast %63 : vector<1x8x256xf32> to vector<8x256xf32>
    %65 = arith.mulf %64, %62 : vector<8x256xf32>
    %66 = arith.addf %61, %65 : vector<8x256xf32>
    %c4_35 = arith.constant 4 : index
    %c0_36 = arith.constant 0 : index
    %c0_37 = arith.constant 0 : index
    %67 = vector.load %arg4[%c4_35, %c0_36, %c0_37] : memref<9x8x256xf32, #tpu.memory_space<vmem>>, vector<1x8x256xf32>
    %68 = vector.shape_cast %67 : vector<1x8x256xf32> to vector<8x256xf32>
    %69 = arith.mulf %68, %47 : vector<8x256xf32>
    %70 = arith.addf %66, %69 : vector<8x256xf32>
    %c254_i32 = arith.constant 254 : i32
    %71 = tpu.dynamic_rotate %47 by %c254_i32 dim 1 : vector<8x256xf32>, i32 -> vector<8x256xf32>
    %c5_38 = arith.constant 5 : index
    %c0_39 = arith.constant 0 : index
    %c0_40 = arith.constant 0 : index
    %72 = vector.load %arg4[%c5_38, %c0_39, %c0_40] : memref<9x8x256xf32, #tpu.memory_space<vmem>>, vector<1x8x256xf32>
    %73 = vector.shape_cast %72 : vector<1x8x256xf32> to vector<8x256xf32>
    %74 = arith.mulf %73, %71 : vector<8x256xf32>
    %75 = arith.addf %70, %74 : vector<8x256xf32>
    %c226_i32 = arith.constant 226 : i32
    %76 = tpu.dynamic_rotate %47 by %c226_i32 dim 1 : vector<8x256xf32>, i32 -> vector<8x256xf32>
    %c6_41 = arith.constant 6 : index
    %c0_42 = arith.constant 0 : index
    %c0_43 = arith.constant 0 : index
    %77 = vector.load %arg4[%c6_41, %c0_42, %c0_43] : memref<9x8x256xf32, #tpu.memory_space<vmem>>, vector<1x8x256xf32>
    %78 = vector.shape_cast %77 : vector<1x8x256xf32> to vector<8x256xf32>
    %79 = arith.mulf %78, %76 : vector<8x256xf32>
    %80 = arith.addf %75, %79 : vector<8x256xf32>
    %c224_i32 = arith.constant 224 : i32
    %81 = tpu.dynamic_rotate %47 by %c224_i32 dim 1 : vector<8x256xf32>, i32 -> vector<8x256xf32>
    %c7_44 = arith.constant 7 : index
    %c0_45 = arith.constant 0 : index
    %c0_46 = arith.constant 0 : index
    %82 = vector.load %arg4[%c7_44, %c0_45, %c0_46] : memref<9x8x256xf32, #tpu.memory_space<vmem>>, vector<1x8x256xf32>
    %83 = vector.shape_cast %82 : vector<1x8x256xf32> to vector<8x256xf32>
    %84 = arith.mulf %83, %81 : vector<8x256xf32>
    %85 = arith.addf %80, %84 : vector<8x256xf32>
    %c222_i32 = arith.constant 222 : i32
    %86 = tpu.dynamic_rotate %47 by %c222_i32 dim 1 : vector<8x256xf32>, i32 -> vector<8x256xf32>
    %c8_47 = arith.constant 8 : index
    %c0_48 = arith.constant 0 : index
    %c0_49 = arith.constant 0 : index
    %87 = vector.load %arg4[%c8_47, %c0_48, %c0_49] : memref<9x8x256xf32, #tpu.memory_space<vmem>>, vector<1x8x256xf32>
    %88 = vector.shape_cast %87 : vector<1x8x256xf32> to vector<8x256xf32>
    %89 = arith.mulf %88, %86 : vector<8x256xf32>
    %90 = arith.addf %85, %89 : vector<8x256xf32>
    %c0_50 = arith.constant 0 : index
    %c0_51 = arith.constant 0 : index
    %91 = vector.load %arg5[%c0_50, %c0_51] : memref<8x1xf32, #tpu.memory_space<vmem>>, vector<8x1xf32>
    %92 = vector.broadcast %91 : vector<8x1xf32> to vector<8x256xf32>
    %93 = arith.addf %90, %92 : vector<8x256xf32>
    %94 = tpu.concatenate %1, %93 in 0 : vector<8x256xf32>, vector<8x256xf32> -> vector<16x256xf32>
    %c0_52 = arith.constant 0 : index
    %c0_53 = arith.constant 0 : index
    %95 = vector.load %arg6[%c0_52, %c0_53] : memref<16x16xf32, #tpu.memory_space<vmem>>, vector<16x16xf32>
    %cst = arith.constant dense<0.000000e+00> : vector<16x256xf32>
    %96 = tpu.matmul %95, %94, %cst {dimension_numbers = #tpu.dot_dimension_numbers<[1], [0], [0], [1], [0, 0, 1, 1], [], []>, precision = #tpu.contract_precision<fp32>} : vector<16x16xf32>, vector<16x256xf32>, vector<16x256xf32> -> vector<16x256xf32>
    %97 = vector.extract_strided_slice %96 {offsets = [0, 0], sizes = [8, 256], strides = [1, 1]} : vector<16x256xf32> to vector<8x256xf32>
    %c0_54 = arith.constant 0 : index
    %c0_55 = arith.constant 0 : index
    %98 = vector.load %arg7[%c0_54, %c0_55] : memref<8x1xf32, #tpu.memory_space<vmem>>, vector<8x1xf32>
    %99 = vector.broadcast %98 : vector<8x1xf32> to vector<8x256xf32>
    %100 = arith.addf %97, %99 : vector<8x256xf32>
    %101 = vector.extract_strided_slice %96 {offsets = [8, 0], sizes = [8, 256], strides = [1, 1]} : vector<16x256xf32> to vector<8x256xf32>
    %c0_56 = arith.constant 0 : index
    %c0_57 = arith.constant 0 : index
    %102 = vector.load %arg7[%c0_56, %c0_57] : memref<8x1xf32, #tpu.memory_space<vmem>>, vector<8x1xf32>
    %103 = vector.broadcast %102 : vector<8x1xf32> to vector<8x256xf32>
    %104 = arith.addf %101, %103 : vector<8x256xf32>
    %105 = arith.mulf %100, %104 : vector<8x256xf32>
    %c0_58 = arith.constant 0 : index
    %c0_59 = arith.constant 0 : index
    %c0_60 = arith.constant 0 : index
    %106 = vector.load %arg8[%c0_58, %c0_59, %c0_60] : memref<1x8x256xf32, #tpu.memory_space<vmem>>, vector<1x8x256xf32>
    %107 = vector.shape_cast %106 : vector<1x8x256xf32> to vector<8x256xf32>
    %108 = vector.shape_cast %105 : vector<8x256xf32> to vector<1x8x256xf32>
    tpu.vector_store %arg8[%c0_58, %c0_59, %c0_60], %108 {strides = array<i32>} : memref<1x8x256xf32, #tpu.memory_space<vmem>>, vector<1x8x256xf32>,
    return
  }
  func.func @transform_0(%arg0: i32) -> (i32, i32, i32) {
    %c0_i32 = arith.constant 0 : i32
    %c0_i32_0 = arith.constant 0 : i32
    %c0_i32_1 = arith.constant 0 : i32
    return %arg0, %c0_i32, %c0_i32_0 : i32, i32, i32
  }
  func.func @transform_1(%arg0: i32) -> (i32, i32, i32) {
    %c0_i32 = arith.constant 0 : i32
    %c0_i32_0 = arith.constant 0 : i32
    %c0_i32_1 = arith.constant 0 : i32
    %c0_i32_2 = arith.constant 0 : i32
    return %c0_i32, %c0_i32_0, %c0_i32_1 : i32, i32, i32
  }
  func.func @transform_2(%arg0: i32) -> (i32, i32) {
    %c0_i32 = arith.constant 0 : i32
    %c0_i32_0 = arith.constant 0 : i32
    %c0_i32_1 = arith.constant 0 : i32
    return %c0_i32, %c0_i32_0 : i32, i32
  }
  func.func @transform_3(%arg0: i32) -> (i32, i32, i32) {
    %c0_i32 = arith.constant 0 : i32
    %c0_i32_0 = arith.constant 0 : i32
    %c0_i32_1 = arith.constant 0 : i32
    %c0_i32_2 = arith.constant 0 : i32
    return %c0_i32, %c0_i32_0, %c0_i32_1 : i32, i32, i32
  }
  func.func @transform_4(%arg0: i32) -> (i32, i32) {
    %c0_i32 = arith.constant 0 : i32
    %c0_i32_0 = arith.constant 0 : i32
    %c0_i32_1 = arith.constant 0 : i32
    return %c0_i32, %c0_i32_0 : i32, i32
  }
  func.func @transform_5(%arg0: i32) -> (i32, i32) {
    %c0_i32 = arith.constant 0 : i32
    %c0_i32_0 = arith.constant 0 : i32
    %c0_i32_1 = arith.constant 0 : i32
    return %c0_i32, %c0_i32_0 : i32, i32
  }
  func.func @transform_6(%arg0: i32) -> (i32, i32) {
    %c0_i32 = arith.constant 0 : i32
    %c0_i32_0 = arith.constant 0 : i32
    %c0_i32_1 = arith.constant 0 : i32
    return %c0_i32, %c0_i32_0 : i32, i32
  }
  func.func @transform_7(%arg0: i32) -> (i32, i32, i32) {
    %c0_i32 = arith.constant 0 : i32
    %c0_i32_0 = arith.constant 0 : i32
    %c0_i32_1 = arith.constant 0 : i32
    return %arg0, %c0_i32, %c0_i32_0 : i32, i32, i32
  }
}

</mosaic_0001>

<llo_original>
// kernel: tpu_custom_call.1
$region0: #{tpu_custom_call.1}
  #allocation0 [shape = 'u32[]', space=smem, size = 0x4, offset = 0x4, fixed_abs, tag = 'smem constant byte address 0x4 - core index']
  #allocation1 [shape = 'u32[144,128]{1,0:T(1,128)}', space=vmem, size = 0x12000, scoped, tag = 'internal scratch']
  %s0 = inlined_call_operand.hbm [shape: f32[2,8,256], index: 0, kind: input, shape index: {}]
  %s1 = inlined_call_operand.hbm [shape: f32[9,8,256], index: 1, kind: input, shape index: {}]
  %s2 = inlined_call_operand.vmem [shape: f32[8,1], index: 2, kind: input, shape index: {}]
  %s3 = inlined_call_operand.hbm [shape: f32[9,8,256], index: 3, kind: input, shape index: {}]
  %s4 = inlined_call_operand.vmem [shape: f32[8,1], index: 4, kind: input, shape index: {}]
  %s5 = inlined_call_operand.vmem [shape: f32[16,16], index: 5, kind: input, shape index: {}]
  %s6 = inlined_call_operand.vmem [shape: f32[8,1], index: 6, kind: input, shape index: {}]
  %s7 = inlined_call_operand.hbm [shape: f32[2,8,256], index: 7, kind: output, shape index: {}]
  %s8 = sld [smem:[#allocation0]]
  $region73: #{tpu_custom_call.1} parent=0
    _
  %s10 = ssub.s32 1, %s8
  %s11 = scalar_select 0, %s10, %s8
  $region1: #{tpu_custom_call.1} parent=0
    #allocation2 [shape = 'u8[16384]{0}', space=vmem, size = 0x4000, scoped, tag = 'input window, operand 0']
    #allocation3 [shape = 's32[2]{0}', space=sflag, size = 0x8, scoped, tag = 'scoped memory for tpu_custom_call.1']
    #allocation4 [shape = 's32[2]{0}', space=sflag, size = 0x8, scoped, tag = 'scoped memory for tpu_custom_call.1']
    #allocation5 [shape = 'u8[73728]{0}', space=vmem, size = 0x12000, scoped, tag = 'input window, operand 1, single buffered']
    #allocation6 [shape = 's32[1]{0}', space=sflag, size = 0x4, scoped, tag = 'scoped memory for tpu_custom_call.1']
    #allocation7 [shape = 'u8[73728]{0}', space=vmem, size = 0x12000, scoped, tag = 'input window, operand 3, single buffered']
    #allocation8 [shape = 'u8[16384]{0}', space=vmem, size = 0x4000, scoped, tag = 'output window, operand 0']
    %12 = vsyncpa [#allocation3], 0
    %s13 = scalar_lea.sflag [#allocation3], 1
    %14 = vsyncpa %s13, 0
    %15 = vsyncpa [#allocation6], 0
    %16 = vsyncpa [#allocation4], 0
    %s17 = scalar_lea.sflag [#allocation4], 1
    %18 = vsyncpa %s17, 0
    loop: start=0, step=1, limit=4
    $region2: #{tpu_custom_call.1} parent=1 // loop_pre_header
      _
    $region3: #{tpu_custom_call.1} parent=1 // loop_header
      %s20 = sphi 0, %s24
      %p21 = scmp.ge.s32.totalorder %s20, 4
      %s30 = sphi 0, %s32
      %s33 = sphi 0, %s30
      %s34 = sphi 0, %s33
      %s50 = sphi 0, %s34
      %s54 = sphi 0, %s54
      %s56 = sphi 0, %s54
      %s57 = sphi 0, %s56
      %s71 = sphi 0, %s57
      %s75 = sphi 0, %s75
      %s77 = sphi 0, %s75
      %s78 = sphi 0, %s77
      %s92 = sphi 0, %s78
      %s96 = sphi 0, %s96
      %s98 = sphi 0, %s96
      %s99 = sphi 0, %s98
      %s113 = sphi 0, %s99
      %s117 = sphi 0, %s117
      %s119 = sphi 0, %s117
      %s120 = sphi 0, %s119
      %s134 = sphi 0, %s120
      %s138 = sphi 0, %s138
      %s140 = sphi 0, %s138
      %s141 = sphi 0, %s140
      %s155 = sphi 0, %s141
      %s159 = sphi 0, %s159
      %s161 = sphi 0, %s159
      %s162 = sphi 0, %s161
      %s176 = sphi 0, %s162
      %s182 = sphi 0, %s184
      %s185 = sphi 0, %s182
      %s186 = sphi 0, %s185
      %s202 = sphi 0, %s186
    $region4: #{tpu_custom_call.1} parent=1 // loop_header_branch
      %23 = sbr.rel (%p21) target = $region8
    $region5: #{tpu_custom_call.1} parent=1 // loop_body
      %s25 = ssub.s32 %s20, 1
      %s26 = ssub.s32 %s20, 2
      %s27 = sadd.s32 %s20, 1
      %s28 = ssub.s32 %s20, %s27
      %p29 = scmp.eq.s32.totalorder %s28, 0
      %s31 = sadd.s32 %s30, 1
      %s32 = scalar_select %p29, %s30, %s31
      %p35 = pneg %p29
      %p36 = scmp.eq.s32.totalorder %s20, 1
      %p37 = por %p35, %p36
      %p38 = scmp.ne.s32.totalorder %s30, %s33
      %p39 = scmp.eq.s32.totalorder %s20, 0
      %p40 = por %p38, %p39
      %p41 = scmp.ne.s32.totalorder %s30, %s33
      %p42 = scmp.eq.s32.totalorder %s25, 1
      %p43 = por %p41, %p42
      %p44 = scmp.ne.s32.totalorder %s33, %s34
      %p45 = scmp.eq.s32.totalorder %s25, 0
      %p46 = por %p44, %p45
      %p47 = scmp.ne.s32.totalorder %s33, %s34
      %p48 = scmp.eq.s32.totalorder %s26, 1
      %p49 = por %p47, %p48
      %p51 = scmp.ne.s32.totalorder %s34, %s50
      %p52 = scmp.eq.s32.totalorder %s26, 0
      %p53 = por %p51, %p52
      %s55 = sadd.s32 %s54, 1
      %p58 = scmp.eq.s32.totalorder %s20, 1
      %p59 = scmp.ne.s32.totalorder %s54, %s56
      %p60 = scmp.eq.s32.totalorder %s20, 0
      %p61 = por %p59, %p60
      %p62 = scmp.ne.s32.totalorder %s54, %s56
      %p63 = scmp.eq.s32.totalorder %s25, 1
      %p64 = por %p62, %p63
      %p65 = scmp.ne.s32.totalorder %s56, %s57
      %p66 = scmp.eq.s32.totalorder %s25, 0
      %p67 = por %p65, %p66
      %p68 = scmp.ne.s32.totalorder %s56, %s57
      %p69 = scmp.eq.s32.totalorder %s26, 1
      %p70 = por %p68, %p69
      %p72 = scmp.ne.s32.totalorder %s57, %s71
      %p73 = scmp.eq.s32.totalorder %s26, 0
      %p74 = por %p72, %p73
      %s76 = sadd.s32 %s75, 1
      %p79 = scmp.eq.s32.totalorder %s20, 1
      %p80 = scmp.ne.s32.totalorder %s75, %s77
      %p81 = scmp.eq.s32.totalorder %s20, 0
      %p82 = por %p80, %p81
      %p83 = scmp.ne.s32.totalorder %s75, %s77
      %p84 = scmp.eq.s32.totalorder %s25, 1
      %p85 = por %p83, %p84
      %p86 = scmp.ne.s32.totalorder %s77, %s78
      %p87 = scmp.eq.s32.totalorder %s25, 0
      %p88 = por %p86, %p87
      %p89 = scmp.ne.s32.totalorder %s77, %s78
      %p90 = scmp.eq.s32.totalorder %s26, 1
      %p91 = por %p89, %p90
      %p93 = scmp.ne.s32.totalorder %s78, %s92
      %p94 = scmp.eq.s32.totalorder %s26, 0
      %p95 = por %p93, %p94
      %s97 = sadd.s32 %s96, 1
      %p100 = scmp.eq.s32.totalorder %s20, 1
      %p101 = scmp.ne.s32.totalorder %s96, %s98
      %p102 = scmp.eq.s32.totalorder %s20, 0
      %p103 = por %p101, %p102
      %p104 = scmp.ne.s32.totalorder %s96, %s98
      %p105 = scmp.eq.s32.totalorder %s25, 1
      %p106 = por %p104, %p105
      %p107 = scmp.ne.s32.totalorder %s98, %s99
      %p108 = scmp.eq.s32.totalorder %s25, 0
      %p109 = por %p107, %p108
      %p110 = scmp.ne.s32.totalorder %s98, %s99
      %p111 = scmp.eq.s32.totalorder %s26, 1
      %p112 = por %p110, %p111
      %p114 = scmp.ne.s32.totalorder %s99, %s113
      %p115 = scmp.eq.s32.totalorder %s26, 0
      %p116 = por %p114, %p115
      %s118 = sadd.s32 %s117, 1
      %p121 = scmp.eq.s32.totalorder %s20, 1
      %p122 = scmp.ne.s32.totalorder %s117, %s119
      %p123 = scmp.eq.s32.totalorder %s20, 0
      %p124 = por %p122, %p123
      %p125 = scmp.ne.s32.totalorder %s117, %s119
      %p126 = scmp.eq.s32.totalorder %s25, 1
      %p127 = por %p125, %p126
      %p128 = scmp.ne.s32.totalorder %s119, %s120
      %p129 = scmp.eq.s32.totalorder %s25, 0
      %p130 = por %p128, %p129
      %p131 = scmp.ne.s32.totalorder %s119, %s120
      %p132 = scmp.eq.s32.totalorder %s26, 1
      %p133 = por %p131, %p132
      %p135 = scmp.ne.s32.totalorder %s120, %s134
      %p136 = scmp.eq.s32.totalorder %s26, 0
      %p137 = por %p135, %p136
      %s139 = sadd.s32 %s138, 1
      %p142 = scmp.eq.s32.totalorder %s20, 1
      %p143 = scmp.ne.s32.totalorder %s138, %s140
      %p144 = scmp.eq.s32.totalorder %s20, 0
      %p145 = por %p143, %p144
      %p146 = scmp.ne.s32.totalorder %s138, %s140
      %p147 = scmp.eq.s32.totalorder %s25, 1
      %p148 = por %p146, %p147
      %p149 = scmp.ne.s32.totalorder %s140, %s141
      %p150 = scmp.eq.s32.totalorder %s25, 0
      %p151 = por %p149, %p150
      %p152 = scmp.ne.s32.totalorder %s140, %s141
      %p153 = scmp.eq.s32.totalorder %s26, 1
      %p154 = por %p152, %p153
      %p156 = scmp.ne.s32.totalorder %s141, %s155
      %p157 = scmp.eq.s32.totalorder %s26, 0
      %p158 = por %p156, %p157
      %s160 = sadd.s32 %s159, 1
      %p163 = scmp.eq.s32.totalorder %s20, 1
      %p164 = scmp.ne.s32.totalorder %s159, %s161
      %p165 = scmp.eq.s32.totalorder %s20, 0
      %p166 = por %p164, %p165
      %p167 = scmp.ne.s32.totalorder %s159, %s161
      %p168 = scmp.eq.s32.totalorder %s25, 1
      %p169 = por %p167, %p168
      %p170 = scmp.ne.s32.totalorder %s161, %s162
      %p171 = scmp.eq.s32.totalorder %s25, 0
      %p172 = por %p170, %p171
      %p173 = scmp.ne.s32.totalorder %s161, %s162
      %p174 = scmp.eq.s32.totalorder %s26, 1
      %p175 = por %p173, %p174
      %p177 = scmp.ne.s32.totalorder %s162, %s176
      %p178 = scmp.eq.s32.totalorder %s26, 0
      %p179 = por %p177, %p178
      %s180 = ssub.s32 %s20, %s27
      %p181 = scmp.eq.s32.totalorder %s180, 0
      %s183 = sadd.s32 %s182, 1
      %s184 = scalar_select %p181, %s182, %s183
      %p187 = pneg %p181
      %p188 = scmp.eq.s32.totalorder %s20, 1
      %p189 = por %p187, %p188
      %p190 = scmp.ne.s32.totalorder %s182, %s185
      %p191 = scmp.eq.s32.totalorder %s20, 0
      %p192 = por %p190, %p191
      %p193 = scmp.ne.s32.totalorder %s182, %s185
      %p194 = scmp.eq.s32.totalorder %s25, 1
      %p195 = por %p193, %p194
      %p196 = scmp.ne.s32.totalorder %s185, %s186
      %p197 = scmp.eq.s32.totalorder %s25, 0
      %p198 = por %p196, %p197
      %p199 = scmp.ne.s32.totalorder %s185, %s186
      %p200 = scmp.eq.s32.totalorder %s26, 1
      %p201 = por %p199, %p200
      %p203 = scmp.ne.s32.totalorder %s186, %s202
      %p204 = scmp.eq.s32.totalorder %s26, 0
      %p205 = por %p203, %p204
      %p206 = scmp.le.s32.totalorder 1, %s20
      %p207 = scmp.lt.s32.totalorder %s20, 3
      %p208 = pnand %p206, %p207
      %p209 = pneg %p208
      // Predicated region
      $region9: #{tpu_custom_call.1} parent=5 // pred_check
        _
      $region10: #{tpu_custom_call.1} parent=5 // pred_check_branch
        %211 = sbr.rel (%p208) target = $region12
      $region11: #{tpu_custom_call.1} parent=5 // pred_region
        %s212 = ssub.s32 %s20, 1
        // Predicated region
        $region13: #{tpu_custom_call.1} parent=11 // pred_check
          %p213 = pneg %p67
        $region14: #{tpu_custom_call.1} parent=11 // pred_check_branch
          %215 = sbr.rel (%p213) target = $region16
        $region15: #{tpu_custom_call.1} parent=11 // pred_region
          %s217 = ssub.s32 2304, 2304
          %218 = vsyncadd [#allocation6], %s217
          %s219 = sshll.u32 [#allocation5], 4
          %s220 = int_to_ptr.vmem [resolvable:$true] %s219
          %225 = dma.hbm_to_vmem [thread:$0]  %s1, 2304, %s220, [#allocation6], 256, 256, 16
        $region16: #{tpu_custom_call.1} parent=11 // pred_fallthru
          _
        // Predicated region
        $region17: #{tpu_custom_call.1} parent=11 // pred_check
          %p226 = pneg %p88
        $region18: #{tpu_custom_call.1} parent=11 // pred_check_branch
          %228 = sbr.rel (%p226) target = $region20
        $region19: #{tpu_custom_call.1} parent=11 // pred_region
          _
        $region20: #{tpu_custom_call.1} parent=11 // pred_fallthru
          _
        // Predicated region
        $region21: #{tpu_custom_call.1} parent=11 // pred_check
          %p229 = pneg %p109
        $region22: #{tpu_custom_call.1} parent=11 // pred_check_branch
          %231 = sbr.rel (%p229) target = $region24
        $region23: #{tpu_custom_call.1} parent=11 // pred_region
          %s233 = ssub.s32 2304, 2304
          %234 = vsyncadd [#allocation6], %s233
          %s235 = sshll.u32 [#allocation7], 4
          %s236 = int_to_ptr.vmem [resolvable:$true] %s235
          %241 = dma.hbm_to_vmem [thread:$0]  %s3, 2304, %s236, [#allocation6], 256, 256, 16
        $region24: #{tpu_custom_call.1} parent=11 // pred_fallthru
          _
        // Predicated region
        $region25: #{tpu_custom_call.1} parent=11 // pred_check
          %p242 = pneg %p130
        $region26: #{tpu_custom_call.1} parent=11 // pred_check_branch
          %244 = sbr.rel (%p242) target = $region28
        $region27: #{tpu_custom_call.1} parent=11 // pred_region
          _
        $region28: #{tpu_custom_call.1} parent=11 // pred_fallthru
          _
        // Predicated region
        $region29: #{tpu_custom_call.1} parent=11 // pred_check
          %p245 = pneg %p151
        $region30: #{tpu_custom_call.1} parent=11 // pred_check_branch
          %247 = sbr.rel (%p245) target = $region32
        $region31: #{tpu_custom_call.1} parent=11 // pred_region
          _
        $region32: #{tpu_custom_call.1} parent=11 // pred_fallthru
          _
        // Predicated region
        $region33: #{tpu_custom_call.1} parent=11 // pred_check
          %p248 = pneg %p172
        $region34: #{tpu_custom_call.1} parent=11 // pred_check_branch
          %250 = sbr.rel (%p248) target = $region36
        $region35: #{tpu_custom_call.1} parent=11 // pred_region
          _
        $region36: #{tpu_custom_call.1} parent=11 // pred_fallthru
          _
      $region12: #{tpu_custom_call.1} parent=5 // pred_fallthru
        _
      %p251 = scmp.lt.s32.totalorder %s20, 2
      // Predicated region
      $region37: #{tpu_custom_call.1} parent=5 // pred_check
        %p252 = pneg %p251
      $region38: #{tpu_custom_call.1} parent=5 // pred_check_branch
        %254 = sbr.rel (%p252) target = $region40
      $region39: #{tpu_custom_call.1} parent=5 // pred_region
        // Predicated region
        $region41: #{tpu_custom_call.1} parent=39 // pred_check
          %p255 = pneg %p40
        $region42: #{tpu_custom_call.1} parent=39 // pred_check_branch
          %257 = sbr.rel (%p255) target = $region44
        $region43: #{tpu_custom_call.1} parent=39 // pred_region
          %s258 = sand.u32 %s30, 1
          %s259 = scalar_lea.sflag [#allocation3], %s258
          %s260 = sand.u32 %s30, 1
          %s261 = smul.addr %s260, 16
          %s262 = scalar_lea.vmem [#allocation2], %s261
          %s264 = ssub.s32 256, 256
          %265 = vsyncadd %s259, %s264
          %s266 = smul.addr %s20, 2
          %s267 = smul.addr %s266, 128
          %s268 = scalar_lea.hbm %s0, %s267
          %s270 = sshll.u32 %s262, 4
          %s271 = int_to_ptr.vmem [resolvable:$true] %s270
          %273 = dma.hbm_to_vmem [thread:$0]  %s268, 256, %s271, %s259
        $region44: #{tpu_custom_call.1} parent=39 // pred_fallthru
          _
      $region40: #{tpu_custom_call.1} parent=5 // pred_fallthru
        _
      %p274 = scmp.le.s32.totalorder 1, %s20
      %p275 = scmp.lt.s32.totalorder %s20, 3
      %p276 = pnand %p274, %p275
      %p277 = pneg %p276
      // Predicated region
      $region45: #{tpu_custom_call.1} parent=5 // pred_check
        _
      $region46: #{tpu_custom_call.1} parent=5 // pred_check_branch
        %279 = sbr.rel (%p276) target = $region48
      $region47: #{tpu_custom_call.1} parent=5 // pred_region
        %s280 = ssub.s32 %s20, 1
        %s281 = sand.u32 %s33, 1
        %s282 = scalar_lea.sflag [#allocation3], %s281
        %s283 = sand.u32 %s33, 1
        %s284 = smul.addr %s283, 16
        %s285 = scalar_lea.vmem [#allocation2], %s284
        // Predicated region
        $region49: #{tpu_custom_call.1} parent=47 // pred_check
          %p286 = pneg %p46
        $region50: #{tpu_custom_call.1} parent=47 // pred_check_branch
          %288 = sbr.rel (%p286) target = $region52
        $region51: #{tpu_custom_call.1} parent=47 // pred_region
          %289 = dma.done %s282, 256
        $region52: #{tpu_custom_call.1} parent=47 // pred_fallthru
          _
        // Predicated region
        $region53: #{tpu_custom_call.1} parent=47 // pred_check
          %p290 = pneg %p67
        $region54: #{tpu_custom_call.1} parent=47 // pred_check_branch
          %292 = sbr.rel (%p290) target = $region56
        $region55: #{tpu_custom_call.1} parent=47 // pred_region
          %293 = dma.done [#allocation6], 2304
        $region56: #{tpu_custom_call.1} parent=47 // pred_fallthru
          _
        // Predicated region
        $region57: #{tpu_custom_call.1} parent=47 // pred_check
          %p294 = pneg %p109
        $region58: #{tpu_custom_call.1} parent=47 // pred_check_branch
          %296 = sbr.rel (%p294) target = $region60
        $region59: #{tpu_custom_call.1} parent=47 // pred_region
          %297 = dma.done [#allocation6], 2304
        $region60: #{tpu_custom_call.1} parent=47 // pred_fallthru
          _
        %s298 = sand.u32 %s33, 1
        %s299 = scalar_lea.sflag [#allocation3], %s298
        %s300 = sand.u32 %s33, 1
        %s301 = smul.addr %s300, 16
        %s302 = scalar_lea.vmem [#allocation2], %s301
        %p303 = pneg %p46
        %p304 = pneg %p43
        %p305 = pneg %p67
        %p306 = pneg %p64
        %p307 = pneg %p88
        %p308 = pneg %p85
        %p309 = pneg %p109
        %p310 = pneg %p106
        %p311 = pneg %p130
        %p312 = pneg %p127
        %p313 = pneg %p151
        %p314 = pneg %p148
        %p315 = pneg %p172
        %p316 = pneg %p169
        %p317 = pneg %p198
        %p318 = pneg %p195
        %s319 = sand.u32 %s185, 1
        %s320 = scalar_lea.sflag [#allocation4], %s319
        %s321 = sand.u32 %s185, 1
        %s322 = smul.addr %s321, 16
        %s323 = scalar_lea.vmem [#allocation8], %s322
        %v324 = vld [vmem:[%s285] sm:$0xff]
        %v325 = vld [vmem:[%s285 + $0x8] sm:$0xff]
        %326 = vrot.lane.b32.xlu0 %v324, 17
        %v327 = vpop.permute.xlu0 %326
        %328 = vrot.lane.b32.xlu0 %v325, 17
        %v329 = vpop.permute.xlu0 %328
        %v330 = vlaneseq
        %v331 = vand.u32 %v330, 127
        %vm332 = vcmp.lt.s32.totalorder %v331, 17
        %v333 = vsel %vm332, %v327, %v329
        %v334 = vsel %vm332, %v329, %v327
        %v335 = vld [vmem:[#allocation5] sm:$0xff]
        %v336 = vld [vmem:[#allocation5 + $0x8] sm:$0xff]
        %v337 = vmul.f32 %v335, %v334
        %v338 = vmul.f32 %v336, %v333
        %339 = vrot.lane.b32.xlu0 %v324, 16
        %v340 = vpop.permute.xlu0 %339
        %341 = vrot.lane.b32.xlu0 %v325, 16
        %v342 = vpop.permute.xlu0 %341
        %vm343 = vcmp.lt.s32.totalorder %v331, 16
        %v344 = vsel %vm343, %v340, %v342
        %v345 = vsel %vm343, %v342, %v340
        %s346 = scalar_lea.vmem [#allocation5], 16
        %v347 = vld [vmem:[%s346] sm:$0xff]
        %v348 = vld [vmem:[%s346 + $0x8] sm:$0xff]
        %v349 = vmul.f32 %v347, %v345
        %v350 = vmul.f32 %v348, %v344
        %v351 = vadd.f32 %v337, %v349
        %v352 = vadd.f32 %v338, %v350
        %353 = vrot.lane.b32.xlu0 %v324, 15
        %v354 = vpop.permute.xlu0 %353
        %355 = vrot.lane.b32.xlu0 %v325, 15
        %v356 = vpop.permute.xlu0 %355
        %vm357 = vcmp.lt.s32.totalorder %v331, 15
        %v358 = vsel %vm357, %v354, %v356
        %v359 = vsel %vm357, %v356, %v354
        %s360 = scalar_lea.vmem [#allocation5], 32
        %v361 = vld [vmem:[%s360] sm:$0xff]
        %v362 = vld [vmem:[%s360 + $0x8] sm:$0xff]
        %v363 = vmul.f32 %v361, %v359
        %v364 = vmul.f32 %v362, %v358
        %v365 = vadd.f32 %v351, %v363
        %v366 = vadd.f32 %v352, %v364
        %367 = vrot.lane.b32.xlu0 %v324, 1
        %v368 = vpop.permute.xlu0 %367
        %369 = vrot.lane.b32.xlu0 %v325, 1
        %v370 = vpop.permute.xlu0 %369
        %vm371 = vcmp.lt.s32.totalorder %v331, 1
        %v372 = vsel %vm371, %v368, %v370
        %v373 = vsel %vm371, %v370, %v368
        %s374 = scalar_lea.vmem [#allocation5], 48
        %v375 = vld [vmem:[%s374] sm:$0xff]
        %v376 = vld [vmem:[%s374 + $0x8] sm:$0xff]
        %v377 = vmul.f32 %v375, %v373
        %v378 = vmul.f32 %v376, %v372
        %v379 = vadd.f32 %v365, %v377
        %v380 = vadd.f32 %v366, %v378
        %s381 = scalar_lea.vmem [#allocation5], 64
        %v382 = vld [vmem:[%s381] sm:$0xff]
        %v383 = vld [vmem:[%s381 + $0x8] sm:$0xff]
        %v384 = vmul.f32 %v382, %v324
        %v385 = vmul.f32 %v383, %v325
        %v386 = vadd.f32 %v379, %v384
        %v387 = vadd.f32 %v380, %v385
        %388 = vrot.lane.b32.xlu0 %v324, 127
        %v389 = vpop.permute.xlu0 %388
        %390 = vrot.lane.b32.xlu0 %v325, 127
        %v391 = vpop.permute.xlu0 %390
        %vm392 = vcmp.lt.s32.totalorder %v331, 127
        %v393 = vsel %vm392, %v389, %v391
        %v394 = vsel %vm392, %v391, %v389
        %s395 = scalar_lea.vmem [#allocation5], 80
        %v396 = vld [vmem:[%s395] sm:$0xff]
        %v397 = vld [vmem:[%s395 + $0x8] sm:$0xff]
        %v398 = vmul.f32 %v396, %v393
        %v399 = vmul.f32 %v397, %v394
        %v400 = vadd.f32 %v386, %v398
        %v401 = vadd.f32 %v387, %v399
        %402 = vrot.lane.b32.xlu0 %v324, 113
        %v403 = vpop.permute.xlu0 %402
        %404 = vrot.lane.b32.xlu0 %v325, 113
        %v405 = vpop.permute.xlu0 %404
        %vm406 = vcmp.lt.s32.totalorder %v331, 113
        %v407 = vsel %vm406, %v403, %v405
        %v408 = vsel %vm406, %v405, %v403
        %s409 = scalar_lea.vmem [#allocation5], 96
        %v410 = vld [vmem:[%s409] sm:$0xff]
        %v411 = vld [vmem:[%s409 + $0x8] sm:$0xff]
        %v412 = vmul.f32 %v410, %v407
        %v413 = vmul.f32 %v411, %v408
        %v414 = vadd.f32 %v400, %v412
        %v415 = vadd.f32 %v401, %v413
        %416 = vrot.lane.b32.xlu0 %v324, 112
        %v417 = vpop.permute.xlu0 %416
        %418 = vrot.lane.b32.xlu0 %v325, 112
        %v419 = vpop.permute.xlu0 %418
        %vm420 = vcmp.lt.s32.totalorder %v331, 112
        %v421 = vsel %vm420, %v417, %v419
        %v422 = vsel %vm420, %v419, %v417
        %s423 = scalar_lea.vmem [#allocation5], 112
        %v424 = vld [vmem:[%s423] sm:$0xff]
        %v425 = vld [vmem:[%s423 + $0x8] sm:$0xff]
        %v426 = vmul.f32 %v424, %v421
        %v427 = vmul.f32 %v425, %v422
        %v428 = vadd.f32 %v414, %v426
        %v429 = vadd.f32 %v415, %v427
        %430 = vrot.lane.b32.xlu0 %v324, 111
        %v431 = vpop.permute.xlu0 %430
        %432 = vrot.lane.b32.xlu0 %v325, 111
        %v433 = vpop.permute.xlu0 %432
        %vm434 = vcmp.lt.s32.totalorder %v331, 111
        %v435 = vsel %vm434, %v431, %v433
        %v436 = vsel %vm434, %v433, %v431
        %s437 = scalar_lea.vmem [#allocation5], 128
        %v438 = vld [vmem:[%s437] sm:$0xff]
        %v439 = vld [vmem:[%s437 + $0x8] sm:$0xff]
        %v440 = vmul.f32 %v438, %v435
        %v441 = vmul.f32 %v439, %v436
        %v442 = vadd.f32 %v428, %v440
        %v443 = vadd.f32 %v429, %v441
        %v444 = vld [vmem:[%s2] sm:$0xff]
        %446 = vset.pattern.permute.xlu0 0
        %447 = vperm.xlu0 %446, %v444
        %v448 = vpop.permute.xlu0 %447
        %v450 = vadd.f32 %v442, %v448
        %v451 = vadd.f32 %v443, %v448
        %452 = vrot.lane.b32.xlu0 %v450, 34
        %v453 = vpop.permute.xlu0 %452
        %454 = vrot.lane.b32.xlu0 %v451, 34
        %v455 = vpop.permute.xlu0 %454
        %vm456 = vcmp.lt.s32.totalorder %v331, 34
        %v457 = vsel %vm456, %v453, %v455
        %v458 = vsel %vm456, %v455, %v453
        %v459 = vld [vmem:[#allocation7] sm:$0xff]
        %v460 = vld [vmem:[#allocation7 + $0x8] sm:$0xff]
        %v461 = vmul.f32 %v459, %v458
        %v462 = vmul.f32 %v460, %v457
        %463 = vrot.lane.b32.xlu0 %v450, 32
        %v464 = vpop.permute.xlu0 %463
        %465 = vrot.lane.b32.xlu0 %v451, 32
        %v466 = vpop.permute.xlu0 %465
        %vm467 = vcmp.lt.s32.totalorder %v331, 32
        %v468 = vsel %vm467, %v464, %v466
        %v469 = vsel %vm467, %v466, %v464
        %s470 = scalar_lea.vmem [#allocation7], 16
        %v471 = vld [vmem:[%s470] sm:$0xff]
        %v472 = vld [vmem:[%s470 + $0x8] sm:$0xff]
        %v473 = vmul.f32 %v471, %v469
        %v474 = vmul.f32 %v472, %v468
        %v475 = vadd.f32 %v461, %v473
        %v476 = vadd.f32 %v462, %v474
        %477 = vrot.lane.b32.xlu0 %v450, 30
        %v478 = vpop.permute.xlu0 %477
        %479 = vrot.lane.b32.xlu0 %v451, 30
        %v480 = vpop.permute.xlu0 %479
        %vm481 = vcmp.lt.s32.totalorder %v331, 30
        %v482 = vsel %vm481, %v478, %v480
        %v483 = vsel %vm481, %v480, %v478
        %s484 = scalar_lea.vmem [#allocation7], 32
        %v485 = vld [vmem:[%s484] sm:$0xff]
        %v486 = vld [vmem:[%s484 + $0x8] sm:$0xff]
        %v487 = vmul.f32 %v485, %v483
        %v488 = vmul.f32 %v486, %v482
        %v489 = vadd.f32 %v475, %v487
        %v490 = vadd.f32 %v476, %v488
        %491 = vrot.lane.b32.xlu0 %v450, 2
        %v492 = vpop.permute.xlu0 %491
        %493 = vrot.lane.b32.xlu0 %v451, 2
        %v494 = vpop.permute.xlu0 %493
        %vm495 = vcmp.lt.s32.totalorder %v331, 2
        %v496 = vsel %vm495, %v492, %v494
        %v497 = vsel %vm495, %v494, %v492
        %s498 = scalar_lea.vmem [#allocation7], 48
        %v499 = vld [vmem:[%s498] sm:$0xff]
        %v500 = vld [vmem:[%s498 + $0x8] sm:$0xff]
        %v501 = vmul.f32 %v499, %v497
        %v502 = vmul.f32 %v500, %v496
        %v503 = vadd.f32 %v489, %v501
        %v504 = vadd.f32 %v490, %v502
        %s505 = scalar_lea.vmem [#allocation7], 64
        %v506 = vld [vmem:[%s505] sm:$0xff]
        %v507 = vld [vmem:[%s505 + $0x8] sm:$0xff]
        %v508 = vmul.f32 %v506, %v450
        %v509 = vmul.f32 %v507, %v451
        %v510 = vadd.f32 %v503, %v508
        %v511 = vadd.f32 %v504, %v509
        %512 = vrot.lane.b32.xlu0 %v450, 126
        %v513 = vpop.permute.xlu0 %512
        %514 = vrot.lane.b32.xlu0 %v451, 126
        %v515 = vpop.permute.xlu0 %514
        %vm516 = vcmp.lt.s32.totalorder %v331, 126
        %v517 = vsel %vm516, %v513, %v515
        %v518 = vsel %vm516, %v515, %v513
        %s519 = scalar_lea.vmem [#allocation7], 80
        %v520 = vld [vmem:[%s519] sm:$0xff]
        %v521 = vld [vmem:[%s519 + $0x8] sm:$0xff]
        %v522 = vmul.f32 %v520, %v517
        %v523 = vmul.f32 %v521, %v518
        %v524 = vadd.f32 %v510, %v522
        %v525 = vadd.f32 %v511, %v523
        %526 = vrot.lane.b32.xlu0 %v450, 98
        %v527 = vpop.permute.xlu0 %526
        %528 = vrot.lane.b32.xlu0 %v451, 98
        %v529 = vpop.permute.xlu0 %528
        %vm530 = vcmp.lt.s32.totalorder %v331, 98
        %v531 = vsel %vm530, %v527, %v529
        %v532 = vsel %vm530, %v529, %v527
        %s533 = scalar_lea.vmem [#allocation7], 96
        %v534 = vld [vmem:[%s533] sm:$0xff]
        %v535 = vld [vmem:[%s533 + $0x8] sm:$0xff]
        %v536 = vmul.f32 %v534, %v531
        %v537 = vmul.f32 %v535, %v532
        %v538 = vadd.f32 %v524, %v536
        %v539 = vadd.f32 %v525, %v537
        %540 = vrot.lane.b32.xlu0 %v450, 96
        %v541 = vpop.permute.xlu0 %540
        %542 = vrot.lane.b32.xlu0 %v451, 96
        %v543 = vpop.permute.xlu0 %542
        %vm544 = vcmp.lt.s32.totalorder %v331, 96
        %v545 = vsel %vm544, %v541, %v543
        %v546 = vsel %vm544, %v543, %v541
        %s547 = scalar_lea.vmem [#allocation7], 112
        %v548 = vld [vmem:[%s547] sm:$0xff]
        %v549 = vld [vmem:[%s547 + $0x8] sm:$0xff]
        %v550 = vmul.f32 %v548, %v545
        %v551 = vmul.f32 %v549, %v546
        %v552 = vadd.f32 %v538, %v550
        %v553 = vadd.f32 %v539, %v551
        %554 = vrot.lane.b32.xlu0 %v450, 94
        %v555 = vpop.permute.xlu0 %554
        %556 = vrot.lane.b32.xlu0 %v451, 94
        %v557 = vpop.permute.xlu0 %556
        %vm558 = vcmp.lt.s32.totalorder %v331, 94
        %v559 = vsel %vm558, %v555, %v557
        %v560 = vsel %vm558, %v557, %v555
        %s561 = scalar_lea.vmem [#allocation7], 128
        %v562 = vld [vmem:[%s561] sm:$0xff]
        %v563 = vld [vmem:[%s561 + $0x8] sm:$0xff]
        %v564 = vmul.f32 %v562, %v559
        %v565 = vmul.f32 %v563, %v560
        %v566 = vadd.f32 %v552, %v564
        %v567 = vadd.f32 %v553, %v565
        %v568 = vld [vmem:[%s4] sm:$0xff]
        %570 = vset.pattern.permute.xlu0 0
        %571 = vperm.xlu0 %570, %v568
        %v572 = vpop.permute.xlu0 %571
        %v574 = vadd.f32 %v566, %v572
        %v575 = vadd.f32 %v567, %v572
        %v576 = vld [vmem:[%s5] sm:$0xff]
        %v577 = vld [vmem:[%s5 + $0x8] sm:$0xff]
        %vm578 = vcmask 130048
        %v580 = vsel %vm578, %v576, 0
        %v583 = vsel %vm578, %v577, 0
        %v585 = vand.u32 %v325, 4294901760
        %586 = vmatprep.subr.mxu0 %v585
        %v587 = vand.u32 %v324, 4294901760
        %588 = vmatpush1.msra.mxu0 %v587
        %v589 = vand.u32 %v575, 4294901760
        %590 = vmatprep.subr.mxu0 %v589
        %v591 = vand.u32 %v574, 4294901760
        %592 = vmatpush1.msra.mxu0 %v591
        %593 = vmatprep.subr.mxu0 0.0
        %594 = vmatpush1.msra.mxu0 0.0
        %595 = vmatprep.subr.mxu0 0.0
        %596 = vmatpush1.msra.mxu0 0.0
        %597 = vmatprep.subr.mxu0 0.0
        %598 = vmatpush1.msra.mxu0 0.0
        %599 = vmatprep.subr.mxu0 0.0
        %600 = vmatpush1.msra.mxu0 0.0
        %601 = vmatprep.subr.mxu0 0.0
        %602 = vmatpush1.msra.mxu0 0.0
        %603 = vmatprep.subr.mxu0 0.0
        %604 = vmatpush1.msra.mxu0 0.0
        %605 = vmatprep.subr.mxu0 0.0
        %606 = vmatpush1.msra.mxu0 0.0
        %607 = vmatprep.subr.mxu0 0.0
        %608 = vmatpush1.msra.mxu0 0.0
        %609 = vmatprep.subr.mxu0 0.0
        %610 = vmatpush1.msra.mxu0 0.0
        %611 = vmatprep.subr.mxu0 0.0
        %612 = vmatpush1.msra.mxu0 0.0
        %613 = vmatprep.subr.mxu0 0.0
        %614 = vmatpush1.msra.mxu0 0.0
        %615 = vmatprep.subr.mxu0 0.0
        %616 = vmatpush1.msra.mxu0 0.0
        %617 = vmatprep.subr.mxu0 0.0
        %618 = vmatpush1.msra.mxu0 0.0
        %619 = vmatprep.subr.mxu0 0.0
        %620 = vmatpush1.msra.mxu0 0.0
        %621 = vmatprep.subr.mxu0 0.0
        %622 = vmatpush1.msra.mxu0 0.0
        %623 = vmatprep.subr.mxu0 0.0
        %624 = vmatpush1.msra.mxu0 0.0
        %625 = vmatprep.subr.mxu0 0.0
        %626 = vmatpush1.msra.mxu0 0.0
        %627 = vmatprep.subr.mxu0 0.0
        %628 = vmatpush1.msra.mxu0 0.0
        %629 = vmatprep.subr.mxu0 0.0
        %630 = vmatpush1.msra.mxu0 0.0
        %631 = vmatprep.subr.mxu0 0.0
        %632 = vmatpush1.msra.mxu0 0.0
        %633 = vmatprep.subr.mxu0 0.0
        %634 = vmatpush1.msra.mxu0 0.0
        %635 = vmatprep.subr.mxu0 0.0
        %636 = vmatpush1.msra.mxu0 0.0
        %637 = vmatprep.subr.mxu0 0.0
        %638 = vmatpush1.msra.mxu0 0.0
        %639 = vmatprep.subr.mxu0 0.0
        %640 = vmatpush1.msra.mxu0 0.0
        %641 = vmatprep.subr.mxu0 0.0
        %642 = vmatpush1.msra.mxu0 0.0
        %643 = vmatprep.subr.mxu0 0.0
        %644 = vmatpush1.msra.mxu0 0.0
        %645 = vmatprep.subr.mxu0 0.0
        %646 = vmatpush1.msra.mxu0 0.0
        %647 = vmatprep.subr.mxu0 0.0
        %648 = vmatpush1.msra.mxu0 0.0
        %649 = vmatprep.subr.mxu0 0.0
        %650 = vmatpush1.msra.mxu0 0.0
        %651 = vmatprep.subr.mxu0 0.0
        %652 = vmatpush1.msra.mxu0 0.0
        %653 = vmatprep.mubr.f32.mxu0 0.0
        %v654 = vand.u32 %v580, 4294901760
        %v655 = vsub.f32 %v580, %v654
        %v656 = vand.u32 %v655, 4294901760
        %v657 = vsub.f32 %v655, %v656
        %v658 = vand.u32 %v657, 4294901760
        %659 = vmatmul.mubr.f32.gmra.mrb[0].mxu0 %v658
        %v660 = vpop.f32.mrb[0].mxu0
        %v661 = vadd.f32 0.0, %v660
        %v662 = vpop.f32.mrb[0].mxu0
        %v663 = vadd.f32 0.0, %v662
        %664 = vmatprep.mubr.f32.mxu0 0.0
        %v665 = vand.u32 %v583, 4294901760
        %v666 = vsub.f32 %v583, %v665
        %v667 = vand.u32 %v666, 4294901760
        %v668 = vsub.f32 %v666, %v667
        %v669 = vand.u32 %v668, 4294901760
        %670 = vmatmul.mubr.f32.gmra.mrb[0].mxu0 %v669
        %v671 = vpop.f32.mrb[0].mxu0
        %v672 = vadd.f32 0.0, %v671
        %v673 = vpop.f32.mrb[0].mxu0
        %v674 = vadd.f32 0.0, %v673
        %675 = vdwg.mxu0
        %v676 = vand.u32 %v325, 4294901760
        %v677 = vsub.f32 %v325, %v676
        %v678 = vand.u32 %v677, 4294901760
        %v679 = vsub.f32 %v677, %v678
        %v680 = vand.u32 %v679, 4294901760
        %681 = vmatprep.subr.mxu0 %v680
        %v682 = vand.u32 %v324, 4294901760
        %v683 = vsub.f32 %v324, %v682
        %v684 = vand.u32 %v683, 4294901760
        %v685 = vsub.f32 %v683, %v684
        %v686 = vand.u32 %v685, 4294901760
        %687 = vmatpush1.msra.mxu0 %v686
        %v688 = vand.u32 %v575, 4294901760
        %v689 = vsub.f32 %v575, %v688
        %v690 = vand.u32 %v689, 4294901760
        %v691 = vsub.f32 %v689, %v690
        %v692 = vand.u32 %v691, 4294901760
        %693 = vmatprep.subr.mxu0 %v692
        %v694 = vand.u32 %v574, 4294901760
        %v695 = vsub.f32 %v574, %v694
        %v696 = vand.u32 %v695, 4294901760
        %v697 = vsub.f32 %v695, %v696
        %v698 = vand.u32 %v697, 4294901760
        %699 = vmatpush1.msra.mxu0 %v698
        %700 = vmatprep.subr.mxu0 0.0
        %701 = vmatpush1.msra.mxu0 0.0
        %702 = vmatprep.subr.mxu0 0.0
        %703 = vmatpush1.msra.mxu0 0.0
        %704 = vmatprep.subr.mxu0 0.0
        %705 = vmatpush1.msra.mxu0 0.0
        %706 = vmatprep.subr.mxu0 0.0
        %707 = vmatpush1.msra.mxu0 0.0
        %708 = vmatprep.subr.mxu0 0.0
        %709 = vmatpush1.msra.mxu0 0.0
        %710 = vmatprep.subr.mxu0 0.0
        %711 = vmatpush1.msra.mxu0 0.0
        %712 = vmatprep.subr.mxu0 0.0
        %713 = vmatpush1.msra.mxu0 0.0
        %714 = vmatprep.subr.mxu0 0.0
        %715 = vmatpush1.msra.mxu0 0.0
        %716 = vmatprep.subr.mxu0 0.0
        %717 = vmatpush1.msra.mxu0 0.0
        %718 = vmatprep.subr.mxu0 0.0
        %719 = vmatpush1.msra.mxu0 0.0
        %720 = vmatprep.subr.mxu0 0.0
        %721 = vmatpush1.msra.mxu0 0.0
        %722 = vmatprep.subr.mxu0 0.0
        %723 = vmatpush1.msra.mxu0 0.0
        %724 = vmatprep.subr.mxu0 0.0
        %725 = vmatpush1.msra.mxu0 0.0
        %726 = vmatprep.subr.mxu0 0.0
        %727 = vmatpush1.msra.mxu0 0.0
        %728 = vmatprep.subr.mxu0 0.0
        %729 = vmatpush1.msra.mxu0 0.0
        %730 = vmatprep.subr.mxu0 0.0
        %731 = vmatpush1.msra.mxu0 0.0
        %732 = vmatprep.subr.mxu0 0.0
        %733 = vmatpush1.msra.mxu0 0.0
        %734 = vmatprep.subr.mxu0 0.0
        %735 = vmatpush1.msra.mxu0 0.0
        %736 = vmatprep.subr.mxu0 0.0
        %737 = vmatpush1.msra.mxu0 0.0
        %738 = vmatprep.subr.mxu0 0.0
        %739 = vmatpush1.msra.mxu0 0.0
        %740 = vmatprep.subr.mxu0 0.0
        %741 = vmatpush1.msra.mxu0 0.0
        %742 = vmatprep.subr.mxu0 0.0
        %743 = vmatpush1.msra.mxu0 0.0
        %744 = vmatprep.subr.mxu0 0.0
        %745 = vmatpush1.msra.mxu0 0.0
        %746 = vmatprep.subr.mxu0 0.0
        %747 = vmatpush1.msra.mxu0 0.0
        %748 = vmatprep.subr.mxu0 0.0
        %749 = vmatpush1.msra.mxu0 0.0
        %750 = vmatprep.subr.mxu0 0.0
        %751 = vmatpush1.msra.mxu0 0.0
        %752 = vmatprep.subr.mxu0 0.0
        %753 = vmatpush1.msra.mxu0 0.0
        %754 = vmatprep.subr.mxu0 0.0
        %755 = vmatpush1.msra.mxu0 0.0
        %756 = vmatprep.subr.mxu0 0.0
        %757 = vmatpush1.msra.mxu0 0.0
        %758 = vmatprep.subr.mxu0 0.0
        %759 = vmatpush1.msra.mxu0 0.0
        %760 = vmatprep.mubr.f32.mxu0 0.0
        %v761 = vand.u32 %v580, 4294901760
        %762 = vmatmul.mubr.f32.gmra.mrb[0].mxu0 %v761
        %v763 = vpop.f32.mrb[0].mxu0
        %v764 = vadd.f32 %v661, %v763
        %v765 = vpop.f32.mrb[0].mxu0
        %v766 = vadd.f32 %v663, %v765
        %767 = vmatprep.mubr.f32.mxu0 0.0
        %v768 = vand.u32 %v583, 4294901760
        %769 = vmatmul.mubr.f32.gmra.mrb[0].mxu0 %v768
        %v770 = vpop.f32.mrb[0].mxu0
        %v771 = vadd.f32 %v672, %v770
        %v772 = vpop.f32.mrb[0].mxu0
        %v773 = vadd.f32 %v674, %v772
        %774 = vdwg.mxu0
        %v775 = vand.u32 %v325, 4294901760
        %v776 = vsub.f32 %v325, %v775
        %777 = vmatprep.subr.mxu0 %v776
        %v778 = vand.u32 %v324, 4294901760
        %v779 = vsub.f32 %v324, %v778
        %780 = vmatpush1.msra.mxu0 %v779
        %v781 = vand.u32 %v575, 4294901760
        %v782 = vsub.f32 %v575, %v781
        %783 = vmatprep.subr.mxu0 %v782
        %v784 = vand.u32 %v574, 4294901760
        %v785 = vsub.f32 %v574, %v784
        %786 = vmatpush1.msra.mxu0 %v785
        %787 = vmatprep.subr.mxu0 0.0
        %788 = vmatpush1.msra.mxu0 0.0
        %789 = vmatprep.subr.mxu0 0.0
        %790 = vmatpush1.msra.mxu0 0.0
        %791 = vmatprep.subr.mxu0 0.0
        %792 = vmatpush1.msra.mxu0 0.0
        %793 = vmatprep.subr.mxu0 0.0
        %794 = vmatpush1.msra.mxu0 0.0
        %795 = vmatprep.subr.mxu0 0.0
        %796 = vmatpush1.msra.mxu0 0.0
        %797 = vmatprep.subr.mxu0 0.0
        %798 = vmatpush1.msra.mxu0 0.0
        %799 = vmatprep.subr.mxu0 0.0
        %800 = vmatpush1.msra.mxu0 0.0
        %801 = vmatprep.subr.mxu0 0.0
        %802 = vmatpush1.msra.mxu0 0.0
        %803 = vmatprep.subr.mxu0 0.0
        %804 = vmatpush1.msra.mxu0 0.0
        %805 = vmatprep.subr.mxu0 0.0
        %806 = vmatpush1.msra.mxu0 0.0
        %807 = vmatprep.subr.mxu0 0.0
        %808 = vmatpush1.msra.mxu0 0.0
        %809 = vmatprep.subr.mxu0 0.0
        %810 = vmatpush1.msra.mxu0 0.0
        %811 = vmatprep.subr.mxu0 0.0
        %812 = vmatpush1.msra.mxu0 0.0
        %813 = vmatprep.subr.mxu0 0.0
        %814 = vmatpush1.msra.mxu0 0.0
        %815 = vmatprep.subr.mxu0 0.0
        %816 = vmatpush1.msra.mxu0 0.0
        %817 = vmatprep.subr.mxu0 0.0
        %818 = vmatpush1.msra.mxu0 0.0
        %819 = vmatprep.subr.mxu0 0.0
        %820 = vmatpush1.msra.mxu0 0.0
        %821 = vmatprep.subr.mxu0 0.0
        %822 = vmatpush1.msra.mxu0 0.0
        %823 = vmatprep.subr.mxu0 0.0
        %824 = vmatpush1.msra.mxu0 0.0
        %825 = vmatprep.subr.mxu0 0.0
        %826 = vmatpush1.msra.mxu0 0.0
        %827 = vmatprep.subr.mxu0 0.0
        %828 = vmatpush1.msra.mxu0 0.0
        %829 = vmatprep.subr.mxu0 0.0
        %830 = vmatpush1.msra.mxu0 0.0
        %831 = vmatprep.subr.mxu0 0.0
        %832 = vmatpush1.msra.mxu0 0.0
        %833 = vmatprep.subr.mxu0 0.0
        %834 = vmatpush1.msra.mxu0 0.0
        %835 = vmatprep.subr.mxu0 0.0
        %836 = vmatpush1.msra.mxu0 0.0
        %837 = vmatprep.subr.mxu0 0.0
        %838 = vmatpush1.msra.mxu0 0.0
        %839 = vmatprep.subr.mxu0 0.0
        %840 = vmatpush1.msra.mxu0 0.0
        %841 = vmatprep.subr.mxu0 0.0
        %842 = vmatpush1.msra.mxu0 0.0
        %843 = vmatprep.subr.mxu0 0.0
        %844 = vmatpush1.msra.mxu0 0.0
        %845 = vmatprep.subr.mxu0 0.0
        %846 = vmatpush1.msra.mxu0 0.0
        %847 = vmatprep.mubr.f32.mxu0 0.0
        %v848 = vand.u32 %v580, 4294901760
        %v849 = vsub.f32 %v580, %v848
        %850 = vmatmul.mubr.f32.gmra.mrb[0].mxu0 %v849
        %v851 = vpop.f32.mrb[0].mxu0
        %v852 = vadd.f32 %v764, %v851
        %v853 = vpop.f32.mrb[0].mxu0
        %v854 = vadd.f32 %v766, %v853
        %855 = vmatprep.mubr.f32.mxu0 0.0
        %v856 = vand.u32 %v583, 4294901760
        %v857 = vsub.f32 %v583, %v856
        %858 = vmatmul.mubr.f32.gmra.mrb[0].mxu0 %v857
        %v859 = vpop.f32.mrb[0].mxu0
        %v860 = vadd.f32 %v771, %v859
        %v861 = vpop.f32.mrb[0].mxu0
        %v862 = vadd.f32 %v773, %v861
        %863 = vdwg.mxu0
        %v864 = vand.u32 %v325, 4294901760
        %865 = vmatprep.subr.mxu0 %v864
        %v866 = vand.u32 %v324, 4294901760
        %867 = vmatpush1.msra.mxu0 %v866
        %v868 = vand.u32 %v575, 4294901760
        %869 = vmatprep.subr.mxu0 %v868
        %v870 = vand.u32 %v574, 4294901760
        %871 = vmatpush1.msra.mxu0 %v870
        %872 = vmatprep.subr.mxu0 0.0
        %873 = vmatpush1.msra.mxu0 0.0
        %874 = vmatprep.subr.mxu0 0.0
        %875 = vmatpush1.msra.mxu0 0.0
        %876 = vmatprep.subr.mxu0 0.0
        %877 = vmatpush1.msra.mxu0 0.0
        %878 = vmatprep.subr.mxu0 0.0
        %879 = vmatpush1.msra.mxu0 0.0
        %880 = vmatprep.subr.mxu0 0.0
        %881 = vmatpush1.msra.mxu0 0.0
        %882 = vmatprep.subr.mxu0 0.0
        %883 = vmatpush1.msra.mxu0 0.0
        %884 = vmatprep.subr.mxu0 0.0
        %885 = vmatpush1.msra.mxu0 0.0
        %886 = vmatprep.subr.mxu0 0.0
        %887 = vmatpush1.msra.mxu0 0.0
        %888 = vmatprep.subr.mxu0 0.0
        %889 = vmatpush1.msra.mxu0 0.0
        %890 = vmatprep.subr.mxu0 0.0
        %891 = vmatpush1.msra.mxu0 0.0
        %892 = vmatprep.subr.mxu0 0.0
        %893 = vmatpush1.msra.mxu0 0.0
        %894 = vmatprep.subr.mxu0 0.0
        %895 = vmatpush1.msra.mxu0 0.0
        %896 = vmatprep.subr.mxu0 0.0
        %897 = vmatpush1.msra.mxu0 0.0
        %898 = vmatprep.subr.mxu0 0.0
        %899 = vmatpush1.msra.mxu0 0.0
        %900 = vmatprep.subr.mxu0 0.0
        %901 = vmatpush1.msra.mxu0 0.0
        %902 = vmatprep.subr.mxu0 0.0
        %903 = vmatpush1.msra.mxu0 0.0
        %904 = vmatprep.subr.mxu0 0.0
        %905 = vmatpush1.msra.mxu0 0.0
        %906 = vmatprep.subr.mxu0 0.0
        %907 = vmatpush1.msra.mxu0 0.0
        %908 = vmatprep.subr.mxu0 0.0
        %909 = vmatpush1.msra.mxu0 0.0
        %910 = vmatprep.subr.mxu0 0.0
        %911 = vmatpush1.msra.mxu0 0.0
        %912 = vmatprep.subr.mxu0 0.0
        %913 = vmatpush1.msra.mxu0 0.0
        %914 = vmatprep.subr.mxu0 0.0
        %915 = vmatpush1.msra.mxu0 0.0
        %916 = vmatprep.subr.mxu0 0.0
        %917 = vmatpush1.msra.mxu0 0.0
        %918 = vmatprep.subr.mxu0 0.0
        %919 = vmatpush1.msra.mxu0 0.0
        %920 = vmatprep.subr.mxu0 0.0
        %921 = vmatpush1.msra.mxu0 0.0
        %922 = vmatprep.subr.mxu0 0.0
        %923 = vmatpush1.msra.mxu0 0.0
        %924 = vmatprep.subr.mxu0 0.0
        %925 = vmatpush1.msra.mxu0 0.0
        %926 = vmatprep.subr.mxu0 0.0
        %927 = vmatpush1.msra.mxu0 0.0
        %928 = vmatprep.subr.mxu0 0.0
        %929 = vmatpush1.msra.mxu0 0.0
        %930 = vmatprep.subr.mxu0 0.0
        %931 = vmatpush1.msra.mxu0 0.0
        %932 = vmatprep.mubr.f32.mxu0 0.0
        %v933 = vand.u32 %v580, 4294901760
        %v934 = vsub.f32 %v580, %v933
        %v935 = vand.u32 %v934, 4294901760
        %936 = vmatmul.mubr.f32.gmra.mrb[0].mxu0 %v935
        %v937 = vpop.f32.mrb[0].mxu0
        %v938 = vadd.f32 %v852, %v937
        %v939 = vpop.f32.mrb[0].mxu0
        %v940 = vadd.f32 %v854, %v939
        %941 = vmatprep.mubr.f32.mxu0 0.0
        %v942 = vand.u32 %v583, 4294901760
        %v943 = vsub.f32 %v583, %v942
        %v944 = vand.u32 %v943, 4294901760
        %945 = vmatmul.mubr.f32.gmra.mrb[0].mxu0 %v944
        %v946 = vpop.f32.mrb[0].mxu0
        %v947 = vadd.f32 %v860, %v946
        %v948 = vpop.f32.mrb[0].mxu0
        %v949 = vadd.f32 %v862, %v948
        %950 = vdwg.mxu0
        %v951 = vand.u32 %v325, 4294901760
        %v952 = vsub.f32 %v325, %v951
        %v953 = vand.u32 %v952, 4294901760
        %954 = vmatprep.subr.mxu0 %v953
        %v955 = vand.u32 %v324, 4294901760
        %v956 = vsub.f32 %v324, %v955
        %v957 = vand.u32 %v956, 4294901760
        %958 = vmatpush1.msra.mxu0 %v957
        %v959 = vand.u32 %v575, 4294901760
        %v960 = vsub.f32 %v575, %v959
        %v961 = vand.u32 %v960, 4294901760
        %962 = vmatprep.subr.mxu0 %v961
        %v963 = vand.u32 %v574, 4294901760
        %v964 = vsub.f32 %v574, %v963
        %v965 = vand.u32 %v964, 4294901760
        %966 = vmatpush1.msra.mxu0 %v965
        %967 = vmatprep.subr.mxu0 0.0
        %968 = vmatpush1.msra.mxu0 0.0
        %969 = vmatprep.subr.mxu0 0.0
        %970 = vmatpush1.msra.mxu0 0.0
        %971 = vmatprep.subr.mxu0 0.0
        %972 = vmatpush1.msra.mxu0 0.0
        %973 = vmatprep.subr.mxu0 0.0
        %974 = vmatpush1.msra.mxu0 0.0
        %975 = vmatprep.subr.mxu0 0.0
        %976 = vmatpush1.msra.mxu0 0.0
        %977 = vmatprep.subr.mxu0 0.0
        %978 = vmatpush1.msra.mxu0 0.0
        %979 = vmatprep.subr.mxu0 0.0
        %980 = vmatpush1.msra.mxu0 0.0
        %981 = vmatprep.subr.mxu0 0.0
        %982 = vmatpush1.msra.mxu0 0.0
        %983 = vmatprep.subr.mxu0 0.0
        %984 = vmatpush1.msra.mxu0 0.0
        %985 = vmatprep.subr.mxu0 0.0
        %986 = vmatpush1.msra.mxu0 0.0
        %987 = vmatprep.subr.mxu0 0.0
        %988 = vmatpush1.msra.mxu0 0.0
        %989 = vmatprep.subr.mxu0 0.0
        %990 = vmatpush1.msra.mxu0 0.0
        %991 = vmatprep.subr.mxu0 0.0
        %992 = vmatpush1.msra.mxu0 0.0
        %993 = vmatprep.subr.mxu0 0.0
        %994 = vmatpush1.msra.mxu0 0.0
        %995 = vmatprep.subr.mxu0 0.0
        %996 = vmatpush1.msra.mxu0 0.0
        %997 = vmatprep.subr.mxu0 0.0
        %998 = vmatpush1.msra.mxu0 0.0
        %999 = vmatprep.subr.mxu0 0.0
        %1000 = vmatpush1.msra.mxu0 0.0
        %1001 = vmatprep.subr.mxu0 0.0
        %1002 = vmatpush1.msra.mxu0 0.0
        %1003 = vmatprep.subr.mxu0 0.0
        %1004 = vmatpush1.msra.mxu0 0.0
        %1005 = vmatprep.subr.mxu0 0.0
        %1006 = vmatpush1.msra.mxu0 0.0
        %1007 = vmatprep.subr.mxu0 0.0
        %1008 = vmatpush1.msra.mxu0 0.0
        %1009 = vmatprep.subr.mxu0 0.0
        %1010 = vmatpush1.msra.mxu0 0.0
        %1011 = vmatprep.subr.mxu0 0.0
        %1012 = vmatpush1.msra.mxu0 0.0
        %1013 = vmatprep.subr.mxu0 0.0
        %1014 = vmatpush1.msra.mxu0 0.0
        %1015 = vmatprep.subr.mxu0 0.0
        %1016 = vmatpush1.msra.mxu0 0.0
        %1017 = vmatprep.subr.mxu0 0.0
        %1018 = vmatpush1.msra.mxu0 0.0
        %1019 = vmatprep.subr.mxu0 0.0
        %1020 = vmatpush1.msra.mxu0 0.0
        %1021 = vmatprep.subr.mxu0 0.0
        %1022 = vmatpush1.msra.mxu0 0.0
        %1023 = vmatprep.subr.mxu0 0.0
        %1024 = vmatpush1.msra.mxu0 0.0
        %1025 = vmatprep.subr.mxu0 0.0
        %1026 = vmatpush1.msra.mxu0 0.0
        %1027 = vmatprep.mubr.f32.mxu0 0.0
        %v1028 = vand.u32 %v580, 4294901760
        %1029 = vmatmul.mubr.f32.gmra.mrb[0].mxu0 %v1028
        %v1030 = vpop.f32.mrb[0].mxu0
        %v1031 = vadd.f32 %v938, %v1030
        %v1032 = vpop.f32.mrb[0].mxu0
        %v1033 = vadd.f32 %v940, %v1032
        %1034 = vmatprep.mubr.f32.mxu0 0.0
        %v1035 = vand.u32 %v583, 4294901760
        %1036 = vmatmul.mubr.f32.gmra.mrb[0].mxu0 %v1035
        %v1037 = vpop.f32.mrb[0].mxu0
        %v1038 = vadd.f32 %v947, %v1037
        %v1039 = vpop.f32.mrb[0].mxu0
        %v1040 = vadd.f32 %v949, %v1039
        %1041 = vdwg.mxu0
        %v1042 = vand.u32 %v325, 4294901760
        %1043 = vmatprep.subr.mxu0 %v1042
        %v1044 = vand.u32 %v324, 4294901760
        %1045 = vmatpush1.msra.mxu0 %v1044
        %v1046 = vand.u32 %v575, 4294901760
        %1047 = vmatprep.subr.mxu0 %v1046
        %v1048 = vand.u32 %v574, 4294901760
        %1049 = vmatpush1.msra.mxu0 %v1048
        %1050 = vmatprep.subr.mxu0 0.0
        %1051 = vmatpush1.msra.mxu0 0.0
        %1052 = vmatprep.subr.mxu0 0.0
        %1053 = vmatpush1.msra.mxu0 0.0
        %1054 = vmatprep.subr.mxu0 0.0
        %1055 = vmatpush1.msra.mxu0 0.0
        %1056 = vmatprep.subr.mxu0 0.0
        %1057 = vmatpush1.msra.mxu0 0.0
        %1058 = vmatprep.subr.mxu0 0.0
        %1059 = vmatpush1.msra.mxu0 0.0
        %1060 = vmatprep.subr.mxu0 0.0
        %1061 = vmatpush1.msra.mxu0 0.0
        %1062 = vmatprep.subr.mxu0 0.0
        %1063 = vmatpush1.msra.mxu0 0.0
        %1064 = vmatprep.subr.mxu0 0.0
        %1065 = vmatpush1.msra.mxu0 0.0
        %1066 = vmatprep.subr.mxu0 0.0
        %1067 = vmatpush1.msra.mxu0 0.0
        %1068 = vmatprep.subr.mxu0 0.0
        %1069 = vmatpush1.msra.mxu0 0.0
        %1070 = vmatprep.subr.mxu0 0.0
        %1071 = vmatpush1.msra.mxu0 0.0
        %1072 = vmatprep.subr.mxu0 0.0
        %1073 = vmatpush1.msra.mxu0 0.0
        %1074 = vmatprep.subr.mxu0 0.0
        %1075 = vmatpush1.msra.mxu0 0.0
        %1076 = vmatprep.subr.mxu0 0.0
        %1077 = vmatpush1.msra.mxu0 0.0
        %1078 = vmatprep.subr.mxu0 0.0
        %1079 = vmatpush1.msra.mxu0 0.0
        %1080 = vmatprep.subr.mxu0 0.0
        %1081 = vmatpush1.msra.mxu0 0.0
        %1082 = vmatprep.subr.mxu0 0.0
        %1083 = vmatpush1.msra.mxu0 0.0
        %1084 = vmatprep.subr.mxu0 0.0
        %1085 = vmatpush1.msra.mxu0 0.0
        %1086 = vmatprep.subr.mxu0 0.0
        %1087 = vmatpush1.msra.mxu0 0.0
        %1088 = vmatprep.subr.mxu0 0.0
        %1089 = vmatpush1.msra.mxu0 0.0
        %1090 = vmatprep.subr.mxu0 0.0
        %1091 = vmatpush1.msra.mxu0 0.0
        %1092 = vmatprep.subr.mxu0 0.0
        %1093 = vmatpush1.msra.mxu0 0.0
        %1094 = vmatprep.subr.mxu0 0.0
        %1095 = vmatpush1.msra.mxu0 0.0
        %1096 = vmatprep.subr.mxu0 0.0
        %1097 = vmatpush1.msra.mxu0 0.0
        %1098 = vmatprep.subr.mxu0 0.0
        %1099 = vmatpush1.msra.mxu0 0.0
        %1100 = vmatprep.subr.mxu0 0.0
        %1101 = vmatpush1.msra.mxu0 0.0
        %1102 = vmatprep.subr.mxu0 0.0
        %1103 = vmatpush1.msra.mxu0 0.0
        %1104 = vmatprep.subr.mxu0 0.0
        %1105 = vmatpush1.msra.mxu0 0.0
        %1106 = vmatprep.subr.mxu0 0.0
        %1107 = vmatpush1.msra.mxu0 0.0
        %1108 = vmatprep.subr.mxu0 0.0
        %1109 = vmatpush1.msra.mxu0 0.0
        %1110 = vmatprep.mubr.f32.mxu0 0.0
        %v1111 = vand.u32 %v580, 4294901760
        %1112 = vmatmul.mubr.f32.gmra.mrb[0].mxu0 %v1111
        %v1113 = vpop.f32.mrb[0].mxu0
        %v1114 = vadd.f32 %v1031, %v1113
        %v1115 = vpop.f32.mrb[0].mxu0
        %v1116 = vadd.f32 %v1033, %v1115
        %1117 = vmatprep.mubr.f32.mxu0 0.0
        %v1118 = vand.u32 %v583, 4294901760
        %1119 = vmatmul.mubr.f32.gmra.mrb[0].mxu0 %v1118
        %v1120 = vpop.f32.mrb[0].mxu0
        %v1121 = vadd.f32 %v1038, %v1120
        %v1122 = vpop.f32.mrb[0].mxu0
        %v1123 = vadd.f32 %v1040, %v1122
        %1124 = vdwg.mxu0
        %v1125 = vld [vmem:[%s6] sm:$0xff]
        %1127 = vset.pattern.permute.xlu0 0
        %1128 = vperm.xlu0 %1127, %v1125
        %v1129 = vpop.permute.xlu0 %1128
        %v1131 = vadd.f32 %v1114, %v1129
        %v1132 = vadd.f32 %v1116, %v1129
        %v1133 = vadd.f32 %v1121, %v1129
        %v1134 = vadd.f32 %v1123, %v1129
        %v1135 = vmul.f32 %v1131, %v1133
        %v1136 = vmul.f32 %v1132, %v1134
        %1137 = vst [vmem:[%s323] sm:$0xff] %v1135
        %1138 = vst [vmem:[%s323 + $0x8] sm:$0xff] %v1136
        %s1139 = sand.u32 %s185, 1
        %s1140 = scalar_lea.sflag [#allocation4], %s1139
        %s1141 = sand.u32 %s185, 1
        %s1142 = smul.addr %s1141, 16
        %s1143 = scalar_lea.vmem [#allocation8], %s1142
        // Predicated region
        $region61: #{tpu_custom_call.1} parent=47 // pred_check
          %p1144 = pneg %p195
        $region62: #{tpu_custom_call.1} parent=47 // pred_check_branch
          %1146 = sbr.rel (%p1144) target = $region64
        $region63: #{tpu_custom_call.1} parent=47 // pred_region
          %s1148 = ssub.s32 256, 256
          %1149 = vsyncadd %s1140, %s1148
          %s1150 = smul.addr %s25, 2
          %s1151 = smul.addr %s1150, 128
          %s1152 = scalar_lea.hbm %s7, %s1151
          %s1154 = sshll.u32 %s1143, 4
          %s1155 = int_to_ptr.vmem [resolvable:$true] %s1154
          %1157 = dma.vmem_to_hbm [thread:$0]  %s1155, 256, %s1152, %s1140
        $region64: #{tpu_custom_call.1} parent=47 // pred_fallthru
          _
      $region48: #{tpu_custom_call.1} parent=5 // pred_fallthru
        _
      %p1158 = scmp.le.s32.totalorder 2, %s20
      // Predicated region
      $region65: #{tpu_custom_call.1} parent=5 // pred_check
        %p1159 = pneg %p1158
      $region66: #{tpu_custom_call.1} parent=5 // pred_check_branch
        %1161 = sbr.rel (%p1159) target = $region68
      $region67: #{tpu_custom_call.1} parent=5 // pred_region
        %s1162 = ssub.s32 %s20, 2
        // Predicated region
        $region69: #{tpu_custom_call.1} parent=67 // pred_check
          %p1163 = pneg %p201
        $region70: #{tpu_custom_call.1} parent=67 // pred_check_branch
          %1165 = sbr.rel (%p1163) target = $region72
        $region71: #{tpu_custom_call.1} parent=67 // pred_region
          %s1166 = sand.u32 %s186, 1
          %s1167 = scalar_lea.sflag [#allocation4], %s1166
          %s1168 = sand.u32 %s186, 1
          %s1169 = smul.addr %s1168, 16
          %s1170 = scalar_lea.vmem [#allocation8], %s1169
          %1171 = dma.done %s1167, 256
        $region72: #{tpu_custom_call.1} parent=67 // pred_fallthru
          _
      $region68: #{tpu_custom_call.1} parent=5 // pred_fallthru
        _
    $region6: #{tpu_custom_call.1} parent=1 // loop_footer
      %s24 = sadd.s32 1, %s20
    $region7: #{tpu_custom_call.1} parent=1 // loop_footer_branch
      %19 = sbr.rel target = $region3
    $region8: #{tpu_custom_call.1} parent=1 // loop_exit
      _
    %1172 = vsyncpa [#allocation3], 1
    %s1173 = scalar_lea.sflag [#allocation3], 1
    %1174 = vsyncpa %s1173, 1
    %1175 = vsyncpa [#allocation6], 1
    %1176 = vsyncpa [#allocation4], 1
    %s1177 = scalar_lea.sflag [#allocation4], 1
    %1178 = vsyncpa %s1177, 1

</llo_original>
